<compile_context>
chip_gen: v5e
topology: v5e:2x2
jax: 0.10.0
libtpu: 0.0.40
codegen_flags: <defaults>
</compile_context>

<pallas_src>
import functools

import jax
import jax.numpy as jnp
from jax import lax
from jax.experimental import pallas as pl
from jax.experimental.pallas import tpu as pltpu

# ----- MBSeederSLFCAMS.__init__ hyper-parameters (deterministic, in-script) ---
MIN_ = 2             # nbr background seeds sampled per image
MAX_ = 3             # nbr foreground seeds sampled per image
MIN_P = 0.2          # fraction of lowest-activation pixels forming the bg pool
FG_ERODE_K = 3       # erosion structuring element ones(k, k) (odd k)
FG_ERODE_ITER = 1    # nbr erosion iterations applied to the Otsu ROI
KSZ = 3              # dilation structuring element ones(ksz, ksz) (odd ksz)
SUPPORT_BACKGROUND = True
MULTI_LABEL_FLAG = False
SEG_IGNORE_IDX = -255

NBINS = 256
TB = 8               # samples packed per block (batch on sublanes)
VMEM_LIMIT = 32 * 1024 * 1024   # <= default scoped VMEM on v6e/v7x; v7x-safe (64 MiB phys)


def _round_up(x, m):
    return ((x + m - 1) // m) * m


# ============================ in-kernel helpers ===============================
def _dilate1(x, m_r, m_l, m_d, m_u, hw, W):
    """Radius-1 (3x3 ones) binary dilation on (rows, H*W) flattened 0/1 f32 masks.

    Each sublane row is an independent sample (rolls along the lane axis do not mix
    rows).  Out-of-image neighbours contribute 0; border masks are precomputed 0/1
    f32 operands so a neighbour contribution is roll (XLU slot) * mask (one VPU mul).
    """
    nxt = pltpu.roll(x, hw - 1, axis=1) * m_r     # x[k + 1], masked where col == W-1
    prv = pltpu.roll(x, 1, axis=1) * m_l          # x[k - 1], masked where col == 0
    m = jnp.maximum(x, jnp.maximum(nxt, prv))
    dwn = pltpu.roll(m, hw - W, axis=1) * m_d     # m[k + W], masked where row == H-1
    up = pltpu.roll(m, W, axis=1) * m_u           # m[k - W], masked where row == 0
    return jnp.maximum(m, jnp.maximum(dwn, up))


def _erode1(x, m_r, m_l, m_d, m_u, hw, W):
    """Radius-1 binary erosion, border treated as foreground: 1 - dilate(1 - x)."""
    return 1.0 - _dilate1(1.0 - x, m_r, m_l, m_d, m_u, hw, W)


# ================================ kernels =====================================
def _hist_kernel(cam_ref, bins_ref, ones_ref, hist_ref, acc_ref):
    # cam_ref: (1, 1, TN) f32; bins_ref: (256, TN) f32 resident; ones_ref: (TN, 128) bf16
    # resident; acc_ref: (256, 128) f32 VMEM scratch (per-sample histogram, all columns equal).
    t = pl.program_id(1)

    @pl.when(t == 0)
    def _init():
        acc_ref[...] = jnp.zeros_like(acc_ref)

    cam_q = jnp.floor(cam_ref[0] * 255.0)                          # (1, TN); pad pixels -> -255
    onehot = (cam_q == bins_ref[...]).astype(jnp.bfloat16)         # (256, TN), exact 0/1
    # TODO(synk): per-generation narrow one-hot dtype (int8 on v5e/v6e, fp8 on v7x) would
    # halve MXU push traffic; bf16 is the portable exact choice.
    acc_ref[...] += jnp.dot(onehot, ones_ref[...], preferred_element_type=jnp.float32)

    @pl.when(t == pl.num_programs(1) - 1)
    def _finalize():
        hist_ref[0] = acc_ref[...]                                 # lane-dense (256, 128) store


def _make_thresh_erode_kernel(H, W):
    rad = (FG_ERODE_K - 1) // 2
    hw = H * W

    def kernel(cam_ref, th_ref, masks_ref, roi_ref):
        # cam_ref: (TB, HW) f32; th_ref: (TB, 1) f32; masks_ref: (4, HW) f32 resident.
        cam_q = jnp.floor(cam_ref[...] * 255.0)                    # (TB, HW)
        roi = (cam_q > th_ref[...]).astype(jnp.float32)            # per-row broadcast compare
        m = masks_ref[...]
        m_r, m_l, m_d, m_u = m[0:1], m[1:2], m[2:3], m[3:4]
        for _ in range(FG_ERODE_ITER * rad):                       # ones(K) = rad radius-1 steps
            roi = _erode1(roi, m_r, m_l, m_d, m_u, hw, W)
        roi_ref[...] = roi

    return kernel


def _make_dilate_combine_kernel(H, W):
    rad = (KSZ - 1) // 2
    hw = H * W

    def kernel(fg_ref, bg_ref, masks_ref, out_ref):
        # fg_ref / bg_ref: (TB, HW) f32 0/1 seeds; out_ref: (TB, HW) int32.
        m = masks_ref[...]
        m_r, m_l, m_d, m_u = m[0:1], m[1:2], m[2:3], m[3:4]
        # Stack fg and bg on the sublane axis: one roll/mask/max pass covers both maps.
        s = jnp.concatenate([fg_ref[...], bg_ref[...]], axis=0)    # (2*TB, HW)
        for _ in range(rad):
            s = _dilate1(s, m_r, m_l, m_d, m_u, hw, W)
        fg = s[:TB]                                                # tile-aligned sublane split
        bg = s[TB:]
        fg_on = fg > 0.5
        bg_on = bg > 0.5
        both = jnp.logical_and(fg_on, bg_on)                       # conflict -> neither seed
        is_fg = jnp.logical_and(fg_on, jnp.logical_not(both))
        is_bg = jnp.logical_and(bg_on, jnp.logical_not(both))
        out = jnp.where(is_fg, 1, jnp.where(is_bg, 0, SEG_IGNORE_IDX))
        out_ref[...] = out.astype(jnp.int32)

    return kernel


# ============================= pallas wrappers ================================
def pallas_histogram(cam):
    """cam: (B, HW) f32 in [0, 1] -> (B, 256) f32 histogram of floor(cam * 255)."""
    B, HW = cam.shape
    TN = min(4096, _round_up(HW, 128))                 # fixed pixel tile, no divisibility req.
    HW_pad = _round_up(HW, TN)
    cam_pad = jnp.pad(cam, ((0, 0), (0, HW_pad - HW)), constant_values=-1.0)  # -1 -> no bin
    cam_pad = cam_pad.reshape(B, 1, HW_pad)
    bins = jnp.broadcast_to(jnp.arange(NBINS, dtype=jnp.float32)[:, None], (NBINS, TN))
    ones = jnp.ones((TN, 128), jnp.bfloat16)

    out = pl.pallas_call(
        _hist_kernel,
        out_shape=jax.ShapeDtypeStruct((B, NBINS, 128), jnp.float32),
        grid=(B, HW_pad // TN),
        in_specs=[pl.BlockSpec((1, 1, TN), lambda b, t: (b, 0, t)),
                  pl.BlockSpec((NBINS, TN), lambda b, t: (0, 0)),   # resident constants
                  pl.BlockSpec((TN, 128), lambda b, t: (0, 0))],
        out_specs=pl.BlockSpec((1, NBINS, 128), lambda b, t: (b, 0, 0)),
        scratch_shapes=[pltpu.VMEM((NBINS, 128), jnp.float32)],
        compiler_params=pltpu.CompilerParams(
            dimension_semantics=("parallel", "arbitrary"),
            vmem_limit_bytes=VMEM_LIMIT),
    )(cam_pad, bins, ones)
    return out[:, :, 0]                                            # (B, 256)


def pallas_threshold_erode(cam_p, th_p, masks, H, W):
    """cam_p: (B_pad, HW) f32; th_p: (B_pad, 1) f32; masks: (4, HW) f32 -> (B_pad, HW) f32 ROI."""
    B_pad, HW = cam_p.shape
    return pl.pallas_call(
        _make_thresh_erode_kernel(H, W),
        out_shape=jax.ShapeDtypeStruct((B_pad, HW), jnp.float32),
        grid=(B_pad // TB,),
        in_specs=[pl.BlockSpec((TB, HW), lambda b: (b, 0)),
                  pl.BlockSpec((TB, 1), lambda b: (b, 0)),
                  pl.BlockSpec((4, HW), lambda b: (0, 0))],
        out_specs=pl.BlockSpec((TB, HW), lambda b: (b, 0)),
        compiler_params=pltpu.CompilerParams(
            dimension_semantics=("parallel",),
            vmem_limit_bytes=VMEM_LIMIT),
    )(cam_p, th_p, masks)


def pallas_dilate_combine(fg_p, bg_p, masks, H, W):
    """fg_p, bg_p: (B_pad, HW) f32 0/1 seeds -> (B_pad, HW) int32 {1, 0, SEG_IGNORE_IDX}."""
    B_pad, HW = fg_p.shape
    return pl.pallas_call(
        _make_dilate_combine_kernel(H, W),
        out_shape=jax.ShapeDtypeStruct((B_pad, HW), jnp.int32),
        grid=(B_pad // TB,),
        in_specs=[pl.BlockSpec((TB, HW), lambda b: (b, 0)),
                  pl.BlockSpec((TB, HW), lambda b: (b, 0)),
                  pl.BlockSpec((4, HW), lambda b: (0, 0))],
        out_specs=pl.BlockSpec((TB, HW), lambda b: (b, 0)),
        compiler_params=pltpu.CompilerParams(
            dimension_semantics=("parallel",),
            vmem_limit_bytes=VMEM_LIMIT),
    )(fg_p, bg_p, masks)


# ================================ JAX glue ====================================
def _border_masks(H, W):
    """Precomputed (4, HW) f32 masks: [col<W-1, col>0, row<H-1, row>0] (grid-invariant)."""
    k = jnp.arange(H * W, dtype=jnp.int32)
    row = k // W
    col = k % W
    return jnp.stack([col < W - 1, col > 0, row < H - 1, row > 0]).astype(jnp.float32)


def _otsu_from_hist(hist):
    """STOtsu on floor(cam*255) values, reproduced from the 256-bin histogram."""
    bins = jnp.arange(NBINS, dtype=jnp.float32)
    has = hist > 0
    minv = jnp.argmax(has, axis=1)
    maxv = (NBINS - 1) - jnp.argmax(has[:, ::-1], axis=1)
    bad_egg = minv == maxv

    w1 = jnp.cumsum(hist, axis=1)
    w2 = jnp.cumsum(hist[:, ::-1], axis=1)[:, ::-1]
    m1 = jnp.cumsum(hist * bins, axis=1) / jnp.maximum(w1, 1e-12)
    m2 = jnp.cumsum((hist * bins)[:, ::-1], axis=1)[:, ::-1] / jnp.maximum(w2, 1e-12)
    var12 = w1[:, :-1] * w2[:, 1:] * (m1[:, :-1] - m2[:, 1:]) ** 2   # (B, 255)

    idx = jnp.arange(NBINS - 1)
    valid = (idx[None, :] >= minv[:, None]) & (idx[None, :] <= (maxv - 1)[:, None])
    var12 = jnp.where(valid, var12, -jnp.inf)
    th = jnp.argmax(var12, axis=1).astype(jnp.float32)
    return th, bad_egg


def _sample_fg(roi_flat, key):
    # _STFG: pick min(max_, n_fg) foreground pixels uniformly without replacement.
    # TODO(synk): torch.multinomial RNG stream is not reproducible bit-exactly;
    # same distribution via top-MAX_ of iid uniform scores over fg pixels.
    if MAX_ == 0:
        return jnp.zeros(roi_flat.shape, jnp.float32)
    fgm = roi_flat > 0
    n_fg = jnp.sum(fgm.astype(jnp.int32))
    scores = jnp.where(fgm, jax.random.uniform(key, roi_flat.shape), -1.0)
    _, sel_idx = lax.top_k(scores, MAX_)                  # fg pixels sort before the -1s
    take = jnp.minimum(n_fg, MAX_)
    vals = (jnp.arange(MAX_) < take).astype(jnp.float32)
    return jnp.zeros(roi_flat.shape, jnp.float32).at[sel_idx].set(vals)


def _sample_bg_hist(cam_row, hist_row, key, nbr_bg):
    # _STBG: pick min(min_, n_bg) pixels uniformly from the ~nbr_bg lowest-activation pixels.
    # The exact "nbr_bg smallest" pool (O(HW log HW) sort) is replaced by a histogram-derived
    # 20th-percentile bin threshold reusing kernel 1's counts (O(HW)).
    # TODO(synk): ties in the boundary bin can make the pool slightly larger than nbr_bg
    # (vs. torch.sort's arbitrary tie-break); distribution is equal up to that boundary set.
    if MIN_ == 0 or nbr_bg == 0:
        return jnp.zeros(cam_row.shape, jnp.float32)
    csum = jnp.cumsum(hist_row)
    b_star = jnp.argmax(csum >= nbr_bg).astype(jnp.float32)   # smallest bin covering nbr_bg px
    cam_q = jnp.floor(cam_row * 255.0)
    pool = cam_q <= b_star
    n_pool = jnp.sum(pool.astype(jnp.int32))
    scores = jnp.where(pool, jax.random.uniform(key, cam_row.shape), -1.0)
    _, sel_idx = lax.top_k(scores, MIN_)
    take = jnp.minimum(n_pool, MIN_)
    vals = (jnp.arange(MIN_) < take).astype(jnp.float32)
    return jnp.zeros(cam_row.shape, jnp.float32).at[sel_idx].set(vals)


def mb_seeder_forward(x, key):
    """MBSeederSLFCAMS.forward.  x: (B, 1, H, W) f32 CAMs in [0, 1]. -> (B, H, W) i32."""
    B, C, H, W = x.shape
    assert C == 1
    HW = H * W
    nbr_bg = int(MIN_P * H * W)

    cam = jnp.clip(x.reshape(B, HW), 0.0, 1.0)           # clamp before binning (exact counts)

    # ---- Kernel 1: per-sample 256-bin histogram (MXU one-hot reduction) -----
    hist = pallas_histogram(cam)                         # (B, 256) f32

    # ---- Otsu thresholds (tiny 256-bin scan; plain JAX glue) ----------------
    # TODO(synk): could be fused into the histogram kernel's finalize branch to drop a launch.
    th, bad_egg = _otsu_from_hist(hist)
    th = jnp.where(th == 0.0, 1.0, th)
    th = jnp.where(th == 255.0, 254.0, th)

    # ---- batch padding to the sublane tile ----------------------------------
    B_pad = _round_up(B, TB)
    pad_b = B_pad - B
    cam_p = jnp.pad(cam, ((0, pad_b), (0, 0)))
    th_p = jnp.pad(th, (0, pad_b), constant_values=300.0).reshape(B_pad, 1)  # pad rows -> roi 0
    masks = _border_masks(H, W)                          # (4, HW) shared by kernels 2 & 3

    # ---- Kernel 2: threshold + erosion (8 samples per block) ----------------
    roi = pallas_threshold_erode(cam_p, th_p, masks, H, W)[:B]   # (B, HW) f32 {0,1}

    # ---- stochastic fg / bg seed sampling (JAX glue) -------------------------
    kf, kb = jax.random.split(key)
    keys_fg = jax.random.split(kf, B)
    keys_bg = jax.random.split(kb, B)
    fg = jax.vmap(_sample_fg)(roi, keys_fg)                          # (B, HW) f32
    bg = jax.vmap(functools.partial(_sample_bg_hist, nbr_bg=nbr_bg))(cam, hist, keys_bg)
    fg = jnp.where(bad_egg[:, None], 0.0, fg)            # STOtsu.bad_egg -> zero seeds
    bg = jnp.where(bad_egg[:, None], 0.0, bg)

    # ---- Kernel 3: dilation + conflict resolution + ignore fill -------------
    fg_p = jnp.pad(fg, ((0, pad_b), (0, 0)))
    bg_p = jnp.pad(bg, ((0, pad_b), (0, 0)))
    out = pallas_dilate_combine(fg_p, bg_p, masks, H, W)[:B]     # (B, HW) int32
    return out.reshape(B, H, W)


# ================================== main ======================================
if __name__ == "__main__":
    key = jax.random.PRNGKey(0)
    kx, ksel = jax.random.split(key)
    x = jax.random.uniform(kx, (2, 1, 16, 16), dtype=jnp.float32)

    out = jax.jit(mb_seeder_forward)(x, ksel)
    out = jax.block_until_ready(out)

    assert out.shape == (2, 16, 16)
    assert out.dtype == jnp.int32
    assert bool(jnp.all((out == 1) | (out == 0) | (out == SEG_IGNORE_IDX)))
    print("KERNEL_OK")
</pallas_src>

<mosaic_0001>
module attributes {stable_mosaic.version = 11 : i64} {
  func.func @_hist_kernel(%arg0: i32, %arg1: i32, %arg2: memref<1x1x256xf32, #tpu.memory_space<vmem>>, %arg3: memref<256x256xf32, #tpu.memory_space<vmem>>, %arg4: memref<256x128xbf16, #tpu.memory_space<vmem>>, %arg5: memref<1x256x128xf32, #tpu.memory_space<vmem>>, %arg6: memref<256x128xf32, #tpu.memory_space<vmem>>) attributes {dimension_semantics = [#tpu.dimension_semantics<parallel>, #tpu.dimension_semantics<arbitrary>], iteration_bounds = array<i64: 2, 1>, scalar_prefetch = 0 : i64, scratch_operands = 1 : i64, tpu.core_type = #tpu.core_type<tc>, window_params = [{transform_indices = @transform_0, window_bounds = array<i64: 1, 1, 256>}, {pipeline_mode = #tpu.pipeline_mode<synchronous>, transform_indices = @transform_1, window_bounds = array<i64: 256, 256>}, {pipeline_mode = #tpu.pipeline_mode<synchronous>, transform_indices = @transform_2, window_bounds = array<i64: 256, 128>}, {transform_indices = @transform_3, window_bounds = array<i64: 1, 256, 128>}]} {
    %c0_i32 = arith.constant 0 : i32
    %0 = arith.cmpi eq, %arg1, %c0_i32 : i32
    %1 = arith.extui %0 : i1 to i32
    %c0_i32_0 = arith.constant 0 : i32
    %2 = arith.cmpi ne, %1, %c0_i32_0 : i32
    scf.if %2 {
      %cst_14 = arith.constant 0.000000e+00 : f32
      %22 = vector.broadcast %cst_14 : f32 to vector<256x128xf32>
      %c0_15 = arith.constant 0 : index
      %c0_16 = arith.constant 0 : index
      %23 = vector.load %arg6[%c0_15, %c0_16] : memref<256x128xf32, #tpu.memory_space<vmem>>, vector<256x128xf32>
      tpu.vector_store %arg6[%c0_15, %c0_16], %22 {strides = array<i32>} : memref<256x128xf32, #tpu.memory_space<vmem>>, vector<256x128xf32>,
    } else {
    }
    %c0 = arith.constant 0 : index
    %c0_1 = arith.constant 0 : index
    %c0_2 = arith.constant 0 : index
    %3 = vector.load %arg2[%c0, %c0_1, %c0_2] : memref<1x1x256xf32, #tpu.memory_space<vmem>>, vector<1x1x256xf32>
    %4 = vector.shape_cast %3 : vector<1x1x256xf32> to vector<1x256xf32>
    %cst = arith.constant 2.550000e+02 : f32
    %5 = vector.broadcast %cst : f32 to vector<1x256xf32>
    %6 = arith.mulf %4, %5 : vector<1x256xf32>
    %7 = math.floor %6 : vector<1x256xf32>
    %c0_3 = arith.constant 0 : index
    %c0_4 = arith.constant 0 : index
    %8 = vector.load %arg3[%c0_3, %c0_4] : memref<256x256xf32, #tpu.memory_space<vmem>>, vector<256x256xf32>
    %9 = vector.broadcast %7 : vector<1x256xf32> to vector<256x256xf32>
    %10 = arith.cmpf oeq, %9, %8 : vector<256x256xf32>
    %11 = arith.extui %10 : vector<256x256xi1> to vector<256x256xi32>
    %12 = arith.sitofp %11 : vector<256x256xi32> to vector<256x256xf32>
    %13 = arith.truncf %12 : vector<256x256xf32> to vector<256x256xbf16>
    %c0_5 = arith.constant 0 : index
    %c0_6 = arith.constant 0 : index
    %14 = vector.load %arg6[%c0_5, %c0_6] : memref<256x128xf32, #tpu.memory_space<vmem>>, vector<256x128xf32>
    %c0_7 = arith.constant 0 : index
    %c0_8 = arith.constant 0 : index
    %15 = vector.load %arg4[%c0_7, %c0_8] : memref<256x128xbf16, #tpu.memory_space<vmem>>, vector<256x128xbf16>
    %cst_9 = arith.constant dense<0.000000e+00> : vector<256x128xf32>
    %16 = tpu.matmul %13, %15, %cst_9 {dimension_numbers = #tpu.dot_dimension_numbers<[1], [0], [0], [1], [0, 0, 1, 1], [], []>} : vector<256x256xbf16>, vector<256x128xbf16>, vector<256x128xf32> -> vector<256x128xf32>
    %17 = arith.addf %14, %16 : vector<256x128xf32>
    %c0_10 = arith.constant 0 : index
    %c0_11 = arith.constant 0 : index
    %18 = vector.load %arg6[%c0_10, %c0_11] : memref<256x128xf32, #tpu.memory_space<vmem>>, vector<256x128xf32>
    tpu.vector_store %arg6[%c0_10, %c0_11], %17 {strides = array<i32>} : memref<256x128xf32, #tpu.memory_space<vmem>>, vector<256x128xf32>,
    %c0_i32_12 = arith.constant 0 : i32
    %19 = arith.cmpi eq, %arg1, %c0_i32_12 : i32
    %20 = arith.extui %19 : i1 to i32
    %c0_i32_13 = arith.constant 0 : i32
    %21 = arith.cmpi ne, %20, %c0_i32_13 : i32
    scf.if %21 {
      %c0_14 = arith.constant 0 : index
      %c0_15 = arith.constant 0 : index
      %22 = vector.load %arg6[%c0_14, %c0_15] : memref<256x128xf32, #tpu.memory_space<vmem>>, vector<256x128xf32>
      %c0_16 = arith.constant 0 : index
      %c0_17 = arith.constant 0 : index
      %c0_18 = arith.constant 0 : index
      %23 = vector.load %arg5[%c0_16, %c0_17, %c0_18] : memref<1x256x128xf32, #tpu.memory_space<vmem>>, vector<1x256x128xf32>
      %24 = vector.shape_cast %23 : vector<1x256x128xf32> to vector<256x128xf32>
      %25 = vector.shape_cast %22 : vector<256x128xf32> to vector<1x256x128xf32>
      tpu.vector_store %arg5[%c0_16, %c0_17, %c0_18], %25 {strides = array<i32>} : memref<1x256x128xf32, #tpu.memory_space<vmem>>, vector<1x256x128xf32>,
    } else {
    }
    return
  }
  func.func @transform_0(%arg0: i32, %arg1: i32) -> (i32, i32, i32) {
    %c0_i32 = arith.constant 0 : i32
    %c0_i32_0 = arith.constant 0 : i32
    return %arg0, %c0_i32, %arg1 : i32, i32, i32
  }
  func.func @transform_1(%arg0: i32, %arg1: i32) -> (i32, i32) {
    %c0_i32 = arith.constant 0 : i32
    %c0_i32_0 = arith.constant 0 : i32
    %c0_i32_1 = arith.constant 0 : i32
    return %c0_i32, %c0_i32_0 : i32, i32
  }
  func.func @transform_2(%arg0: i32, %arg1: i32) -> (i32, i32) {
    %c0_i32 = arith.constant 0 : i32
    %c0_i32_0 = arith.constant 0 : i32
    %c0_i32_1 = arith.constant 0 : i32
    return %c0_i32, %c0_i32_0 : i32, i32
  }
  func.func @transform_3(%arg0: i32, %arg1: i32) -> (i32, i32, i32) {
    %c0_i32 = arith.constant 0 : i32
    %c0_i32_0 = arith.constant 0 : i32
    %c0_i32_1 = arith.constant 0 : i32
    return %arg0, %c0_i32, %c0_i32_0 : i32, i32, i32
  }
}

module attributes {stable_mosaic.version = 11 : i64} {
  func.func @kernel(%arg0: i32, %arg1: memref<8x256xf32, #tpu.memory_space<vmem>>, %arg2: memref<8x1xf32, #tpu.memory_space<vmem>>, %arg3: memref<4x256xf32, #tpu.memory_space<vmem>>, %arg4: memref<8x256xf32, #tpu.memory_space<vmem>>) attributes {dimension_semantics = [#tpu.dimension_semantics<parallel>], iteration_bounds = array<i64: 1>, scalar_prefetch = 0 : i64, scratch_operands = 0 : i64, tpu.core_type = #tpu.core_type<tc>, window_params = [{transform_indices = @transform_0, window_bounds = array<i64: 8, 256>}, {transform_indices = @transform_1, window_bounds = array<i64: 8, 1>}, {pipeline_mode = #tpu.pipeline_mode<synchronous>, transform_indices = @transform_2, window_bounds = array<i64: 4, 256>}, {transform_indices = @transform_3, window_bounds = array<i64: 8, 256>}]} {
    %c0 = arith.constant 0 : index
    %c0_0 = arith.constant 0 : index
    %0 = vector.load %arg1[%c0, %c0_0] : memref<8x256xf32, #tpu.memory_space<vmem>>, vector<8x256xf32>
    %cst = arith.constant 2.550000e+02 : f32
    %1 = vector.broadcast %cst : f32 to vector<8x256xf32>
    %2 = arith.mulf %0, %1 : vector<8x256xf32>
    %3 = math.floor %2 : vector<8x256xf32>
    %c0_1 = arith.constant 0 : index
    %c0_2 = arith.constant 0 : index
    %4 = vector.load %arg2[%c0_1, %c0_2] : memref<8x1xf32, #tpu.memory_space<vmem>>, vector<8x1xf32>
    %5 = vector.broadcast %4 : vector<8x1xf32> to vector<8x256xf32>
    %6 = arith.cmpf ogt, %3, %5 : vector<8x256xf32>
    %7 = arith.extui %6 : vector<8x256xi1> to vector<8x256xi32>
    %8 = arith.sitofp %7 : vector<8x256xi32> to vector<8x256xf32>
    %c0_3 = arith.constant 0 : index
    %c0_4 = arith.constant 0 : index
    %9 = vector.load %arg3[%c0_3, %c0_4] : memref<4x256xf32, #tpu.memory_space<vmem>>, vector<4x256xf32>
    %10 = vector.extract_strided_slice %9 {offsets = [0, 0], sizes = [1, 256], strides = [1, 1]} : vector<4x256xf32> to vector<1x256xf32>
    %11 = vector.extract_strided_slice %9 {offsets = [1, 0], sizes = [1, 256], strides = [1, 1]} : vector<4x256xf32> to vector<1x256xf32>
    %12 = vector.extract_strided_slice %9 {offsets = [2, 0], sizes = [1, 256], strides = [1, 1]} : vector<4x256xf32> to vector<1x256xf32>
    %13 = vector.extract_strided_slice %9 {offsets = [3, 0], sizes = [1, 256], strides = [1, 1]} : vector<4x256xf32> to vector<1x256xf32>
    %cst_5 = arith.constant 1.000000e+00 : f32
    %14 = vector.broadcast %cst_5 : f32 to vector<8x256xf32>
    %15 = arith.subf %14, %8 : vector<8x256xf32>
    %c255_i32 = arith.constant 255 : i32
    %16 = tpu.dynamic_rotate %15 by %c255_i32 dim 1 : vector<8x256xf32>, i32 -> vector<8x256xf32>
    %17 = vector.broadcast %10 : vector<1x256xf32> to vector<8x256xf32>
    %18 = arith.mulf %16, %17 : vector<8x256xf32>
    %c1_i32 = arith.constant 1 : i32
    %19 = tpu.dynamic_rotate %15 by %c1_i32 dim 1 : vector<8x256xf32>, i32 -> vector<8x256xf32>
    %20 = vector.broadcast %11 : vector<1x256xf32> to vector<8x256xf32>
    %21 = arith.mulf %19, %20 : vector<8x256xf32>
    %22 = arith.maximumf %18, %21 : vector<8x256xf32>
    %23 = arith.maximumf %15, %22 : vector<8x256xf32>
    %c240_i32 = arith.constant 240 : i32
    %24 = tpu.dynamic_rotate %23 by %c240_i32 dim 1 : vector<8x256xf32>, i32 -> vector<8x256xf32>
    %25 = vector.broadcast %12 : vector<1x256xf32> to vector<8x256xf32>
    %26 = arith.mulf %24, %25 : vector<8x256xf32>
    %c16_i32 = arith.constant 16 : i32
    %27 = tpu.dynamic_rotate %23 by %c16_i32 dim 1 : vector<8x256xf32>, i32 -> vector<8x256xf32>
    %28 = vector.broadcast %13 : vector<1x256xf32> to vector<8x256xf32>
    %29 = arith.mulf %27, %28 : vector<8x256xf32>
    %30 = arith.maximumf %26, %29 : vector<8x256xf32>
    %31 = arith.maximumf %23, %30 : vector<8x256xf32>
    %cst_6 = arith.constant 1.000000e+00 : f32
    %32 = vector.broadcast %cst_6 : f32 to vector<8x256xf32>
    %33 = arith.subf %32, %31 : vector<8x256xf32>
    %c0_7 = arith.constant 0 : index
    %c0_8 = arith.constant 0 : index
    %34 = vector.load %arg4[%c0_7, %c0_8] : memref<8x256xf32, #tpu.memory_space<vmem>>, vector<8x256xf32>
    tpu.vector_store %arg4[%c0_7, %c0_8], %33 {strides = array<i32>} : memref<8x256xf32, #tpu.memory_space<vmem>>, vector<8x256xf32>,
    return
  }
  func.func @transform_0(%arg0: i32) -> (i32, i32) {
    %c0_i32 = arith.constant 0 : i32
    %c0_i32_0 = arith.constant 0 : i32
    return %arg0, %c0_i32 : i32, i32
  }
  func.func @transform_1(%arg0: i32) -> (i32, i32) {
    %c0_i32 = arith.constant 0 : i32
    %c0_i32_0 = arith.constant 0 : i32
    return %arg0, %c0_i32 : i32, i32
  }
  func.func @transform_2(%arg0: i32) -> (i32, i32) {
    %c0_i32 = arith.constant 0 : i32
    %c0_i32_0 = arith.constant 0 : i32
    %c0_i32_1 = arith.constant 0 : i32
    return %c0_i32, %c0_i32_0 : i32, i32
  }
  func.func @transform_3(%arg0: i32) -> (i32, i32) {
    %c0_i32 = arith.constant 0 : i32
    %c0_i32_0 = arith.constant 0 : i32
    return %arg0, %c0_i32 : i32, i32
  }
}

module attributes {stable_mosaic.version = 11 : i64} {
  func.func @kernel(%arg0: i32, %arg1: memref<8x256xf32, #tpu.memory_space<vmem>>, %arg2: memref<8x256xf32, #tpu.memory_space<vmem>>, %arg3: memref<4x256xf32, #tpu.memory_space<vmem>>, %arg4: memref<8x256xi32, #tpu.memory_space<vmem>>) attributes {dimension_semantics = [#tpu.dimension_semantics<parallel>], iteration_bounds = array<i64: 1>, scalar_prefetch = 0 : i64, scratch_operands = 0 : i64, tpu.core_type = #tpu.core_type<tc>, window_params = [{transform_indices = @transform_0, window_bounds = array<i64: 8, 256>}, {transform_indices = @transform_1, window_bounds = array<i64: 8, 256>}, {pipeline_mode = #tpu.pipeline_mode<synchronous>, transform_indices = @transform_2, window_bounds = array<i64: 4, 256>}, {transform_indices = @transform_3, window_bounds = array<i64: 8, 256>}]} {
    %c0 = arith.constant 0 : index
    %c0_0 = arith.constant 0 : index
    %0 = vector.load %arg3[%c0, %c0_0] : memref<4x256xf32, #tpu.memory_space<vmem>>, vector<4x256xf32>
    %1 = vector.extract_strided_slice %0 {offsets = [0, 0], sizes = [1, 256], strides = [1, 1]} : vector<4x256xf32> to vector<1x256xf32>
    %2 = vector.extract_strided_slice %0 {offsets = [1, 0], sizes = [1, 256], strides = [1, 1]} : vector<4x256xf32> to vector<1x256xf32>
    %3 = vector.extract_strided_slice %0 {offsets = [2, 0], sizes = [1, 256], strides = [1, 1]} : vector<4x256xf32> to vector<1x256xf32>
    %4 = vector.extract_strided_slice %0 {offsets = [3, 0], sizes = [1, 256], strides = [1, 1]} : vector<4x256xf32> to vector<1x256xf32>
    %c0_1 = arith.constant 0 : index
    %c0_2 = arith.constant 0 : index
    %5 = vector.load %arg1[%c0_1, %c0_2] : memref<8x256xf32, #tpu.memory_space<vmem>>, vector<8x256xf32>
    %c0_3 = arith.constant 0 : index
    %c0_4 = arith.constant 0 : index
    %6 = vector.load %arg2[%c0_3, %c0_4] : memref<8x256xf32, #tpu.memory_space<vmem>>, vector<8x256xf32>
    %7 = tpu.concatenate %5, %6 in 0 : vector<8x256xf32>, vector<8x256xf32> -> vector<16x256xf32>
    %c255_i32 = arith.constant 255 : i32
    %8 = tpu.dynamic_rotate %7 by %c255_i32 dim 1 : vector<16x256xf32>, i32 -> vector<16x256xf32>
    %9 = vector.broadcast %1 : vector<1x256xf32> to vector<16x256xf32>
    %10 = arith.mulf %8, %9 : vector<16x256xf32>
    %c1_i32 = arith.constant 1 : i32
    %11 = tpu.dynamic_rotate %7 by %c1_i32 dim 1 : vector<16x256xf32>, i32 -> vector<16x256xf32>
    %12 = vector.broadcast %2 : vector<1x256xf32> to vector<16x256xf32>
    %13 = arith.mulf %11, %12 : vector<16x256xf32>
    %14 = arith.maximumf %10, %13 : vector<16x256xf32>
    %15 = arith.maximumf %7, %14 : vector<16x256xf32>
    %c240_i32 = arith.constant 240 : i32
    %16 = tpu.dynamic_rotate %15 by %c240_i32 dim 1 : vector<16x256xf32>, i32 -> vector<16x256xf32>
    %17 = vector.broadcast %3 : vector<1x256xf32> to vector<16x256xf32>
    %18 = arith.mulf %16, %17 : vector<16x256xf32>
    %c16_i32 = arith.constant 16 : i32
    %19 = tpu.dynamic_rotate %15 by %c16_i32 dim 1 : vector<16x256xf32>, i32 -> vector<16x256xf32>
    %20 = vector.broadcast %4 : vector<1x256xf32> to vector<16x256xf32>
    %21 = arith.mulf %19, %20 : vector<16x256xf32>
    %22 = arith.maximumf %18, %21 : vector<16x256xf32>
    %23 = arith.maximumf %15, %22 : vector<16x256xf32>
    %24 = vector.extract_strided_slice %23 {offsets = [0, 0], sizes = [8, 256], strides = [1, 1]} : vector<16x256xf32> to vector<8x256xf32>
    %25 = vector.extract_strided_slice %23 {offsets = [8, 0], sizes = [8, 256], strides = [1, 1]} : vector<16x256xf32> to vector<8x256xf32>
    %cst = arith.constant 5.000000e-01 : f32
    %26 = vector.broadcast %cst : f32 to vector<8x256xf32>
    %27 = arith.cmpf ogt, %24, %26 : vector<8x256xf32>
    %cst_5 = arith.constant 5.000000e-01 : f32
    %28 = vector.broadcast %cst_5 : f32 to vector<8x256xf32>
    %29 = arith.cmpf ogt, %25, %28 : vector<8x256xf32>
    %30 = arith.andi %27, %29 : vector<8x256xi1>
    %cst_6 = arith.constant dense<true> : vector<8x256xi1>
    %31 = arith.xori %30, %cst_6 : vector<8x256xi1>
    %32 = arith.andi %27, %31 : vector<8x256xi1>
    %cst_7 = arith.constant dense<true> : vector<8x256xi1>
    %33 = arith.xori %30, %cst_7 : vector<8x256xi1>
    %34 = arith.andi %29, %33 : vector<8x256xi1>
    %c0_i32 = arith.constant 0 : i32
    %c-255_i32 = arith.constant -255 : i32
    %35 = vector.broadcast %c0_i32 : i32 to vector<8x256xi32>
    %36 = vector.broadcast %c-255_i32 : i32 to vector<8x256xi32>
    %37 = arith.select %34, %35, %36 : vector<8x256xi1>, vector<8x256xi32>
    %c1_i32_8 = arith.constant 1 : i32
    %38 = vector.broadcast %c1_i32_8 : i32 to vector<8x256xi32>
    %39 = arith.select %32, %38, %37 : vector<8x256xi1>, vector<8x256xi32>
    %c0_9 = arith.constant 0 : index
    %c0_10 = arith.constant 0 : index
    %40 = vector.load %arg4[%c0_9, %c0_10] : memref<8x256xi32, #tpu.memory_space<vmem>>, vector<8x256xi32>
    tpu.vector_store %arg4[%c0_9, %c0_10], %39 {strides = array<i32>} : memref<8x256xi32, #tpu.memory_space<vmem>>, vector<8x256xi32>,
    return
  }
  func.func @transform_0(%arg0: i32) -> (i32, i32) {
    %c0_i32 = arith.constant 0 : i32
    %c0_i32_0 = arith.constant 0 : i32
    return %arg0, %c0_i32 : i32, i32
  }
  func.func @transform_1(%arg0: i32) -> (i32, i32) {
    %c0_i32 = arith.constant 0 : i32
    %c0_i32_0 = arith.constant 0 : i32
    return %arg0, %c0_i32 : i32, i32
  }
  func.func @transform_2(%arg0: i32) -> (i32, i32) {
    %c0_i32 = arith.constant 0 : i32
    %c0_i32_0 = arith.constant 0 : i32
    %c0_i32_1 = arith.constant 0 : i32
    return %c0_i32, %c0_i32_0 : i32, i32
  }
  func.func @transform_3(%arg0: i32) -> (i32, i32) {
    %c0_i32 = arith.constant 0 : i32
    %c0_i32_0 = arith.constant 0 : i32
    return %arg0, %c0_i32 : i32, i32
  }
}

</mosaic_0001>

<llo_original>
// kernel: mb_seeder_forward.3
$region0: #{mb_seeder_forward.3}
  #allocation0 [shape = 'u32[]', space=smem, size = 0x4, offset = 0x4, fixed_abs, tag = 'smem constant byte address 0x4 - core index']
  #allocation1 [shape = 'u32[72,128]{1,0:T(1,128)}', space=vmem, size = 0x9000, scoped, tag = 'internal scratch']
  #allocation2 [shape = 'f32[256,128]{1,0:T(8,128)}', space=vmem, size = 0x20000, scoped, tag = 'scratch operand']
  %s0 = inlined_call_operand.vmem [shape: f32[2,1,256], index: 0, kind: input, shape index: {}]
  %s1 = inlined_call_operand.vmem [shape: f32[256,256], index: 1, kind: input, shape index: {}]
  %s2 = inlined_call_operand.vmem [shape: bf16[256,128], index: 2, kind: input, shape index: {}]
  %s3 = inlined_call_operand.vmem [shape: f32[2,256,128], index: 3, kind: output, shape index: {}]
  %s4 = sld [smem:[#allocation0]]
  $region53: #{mb_seeder_forward.3} parent=0
    _
  %s6 = ssub.s32 1, %s4
  %s7 = scalar_select 0, %s6, %s4
  loop: start=0, step=1, limit=4
  $region2: #{mb_seeder_forward.3} parent=0 // loop_pre_header
    _
  $region3: #{mb_seeder_forward.3} parent=0 // loop_header
    %s9 = sphi 0, %s13
    %p10 = scmp.ge.s32.totalorder %s9, 4
    %s16 = sphi 0, %s28
    %s17 = sphi 0, %s24
    %s18 = sphi 0, %s16
    %s19 = sphi 0, %s17
    %s20 = sphi 0, %s18
    %s21 = sphi 0, %s19
    %s33 = sphi 0, %s35
    %s36 = sphi 0, %s33
    %s37 = sphi 0, %s36
    %s53 = sphi 0, %s37
    %s57 = sphi 0, %s57
    %s59 = sphi 0, %s57
    %s60 = sphi 0, %s59
    %s74 = sphi 0, %s60
    %s78 = sphi 0, %s78
    %s80 = sphi 0, %s78
    %s81 = sphi 0, %s80
    %s95 = sphi 0, %s81
    %s101 = sphi 0, %s103
    %s104 = sphi 0, %s101
    %s105 = sphi 0, %s104
    %s121 = sphi 0, %s105
  $region4: #{mb_seeder_forward.3} parent=0 // loop_header_branch
    %12 = sbr.rel (%p10) target = $region8
  $region5: #{mb_seeder_forward.3} parent=0 // loop_body
    %s14 = ssub.s32 %s9, 1
    %s15 = ssub.s32 %s9, 2
    %s22 = sadd.s32 1, %s17
    %p23 = scmp.ge.s32.totalorder %s22, 1
    %s24 = scalar_select %p23, 0, %s22
    %s25 = sadd.s32 1, %s16
    %s26 = scalar_select %p23, %s25, %s16
    %p27 = scmp.ge.s32.totalorder %s26, 2
    %s28 = scalar_select %p27, 0, %s26
    %s29 = ssub.s32 %s16, %s28
    %s30 = ssub.s32 %s17, %s24
    %s31 = sor.u32 %s29, %s30
    %p32 = scmp.eq.s32.totalorder %s31, 0
    %s34 = sadd.s32 %s33, 1
    %s35 = scalar_select %p32, %s33, %s34
    %p38 = pneg %p32
    %p39 = scmp.eq.s32.totalorder %s9, 1
    %p40 = por %p38, %p39
    %p41 = scmp.ne.s32.totalorder %s33, %s36
    %p42 = scmp.eq.s32.totalorder %s9, 0
    %p43 = por %p41, %p42
    %p44 = scmp.ne.s32.totalorder %s33, %s36
    %p45 = scmp.eq.s32.totalorder %s14, 1
    %p46 = por %p44, %p45
    %p47 = scmp.ne.s32.totalorder %s36, %s37
    %p48 = scmp.eq.s32.totalorder %s14, 0
    %p49 = por %p47, %p48
    %p50 = scmp.ne.s32.totalorder %s36, %s37
    %p51 = scmp.eq.s32.totalorder %s15, 1
    %p52 = por %p50, %p51
    %p54 = scmp.ne.s32.totalorder %s37, %s53
    %p55 = scmp.eq.s32.totalorder %s15, 0
    %p56 = por %p54, %p55
    %s58 = sadd.s32 %s57, 1
    %p61 = scmp.eq.s32.totalorder %s9, 1
    %p62 = scmp.ne.s32.totalorder %s57, %s59
    %p63 = scmp.eq.s32.totalorder %s9, 0
    %p64 = por %p62, %p63
    %p65 = scmp.ne.s32.totalorder %s57, %s59
    %p66 = scmp.eq.s32.totalorder %s14, 1
    %p67 = por %p65, %p66
    %p68 = scmp.ne.s32.totalorder %s59, %s60
    %p69 = scmp.eq.s32.totalorder %s14, 0
    %p70 = por %p68, %p69
    %p71 = scmp.ne.s32.totalorder %s59, %s60
    %p72 = scmp.eq.s32.totalorder %s15, 1
    %p73 = por %p71, %p72
    %p75 = scmp.ne.s32.totalorder %s60, %s74
    %p76 = scmp.eq.s32.totalorder %s15, 0
    %p77 = por %p75, %p76
    %s79 = sadd.s32 %s78, 1
    %p82 = scmp.eq.s32.totalorder %s9, 1
    %p83 = scmp.ne.s32.totalorder %s78, %s80
    %p84 = scmp.eq.s32.totalorder %s9, 0
    %p85 = por %p83, %p84
    %p86 = scmp.ne.s32.totalorder %s78, %s80
    %p87 = scmp.eq.s32.totalorder %s14, 1
    %p88 = por %p86, %p87
    %p89 = scmp.ne.s32.totalorder %s80, %s81
    %p90 = scmp.eq.s32.totalorder %s14, 0
    %p91 = por %p89, %p90
    %p92 = scmp.ne.s32.totalorder %s80, %s81
    %p93 = scmp.eq.s32.totalorder %s15, 1
    %p94 = por %p92, %p93
    %p96 = scmp.ne.s32.totalorder %s81, %s95
    %p97 = scmp.eq.s32.totalorder %s15, 0
    %p98 = por %p96, %p97
    %s99 = ssub.s32 %s16, %s28
    %p100 = scmp.eq.s32.totalorder %s99, 0
    %s102 = sadd.s32 %s101, 1
    %s103 = scalar_select %p100, %s101, %s102
    %p106 = pneg %p100
    %p107 = scmp.eq.s32.totalorder %s9, 1
    %p108 = por %p106, %p107
    %p109 = scmp.ne.s32.totalorder %s101, %s104
    %p110 = scmp.eq.s32.totalorder %s9, 0
    %p111 = por %p109, %p110
    %p112 = scmp.ne.s32.totalorder %s101, %s104
    %p113 = scmp.eq.s32.totalorder %s14, 1
    %p114 = por %p112, %p113
    %p115 = scmp.ne.s32.totalorder %s104, %s105
    %p116 = scmp.eq.s32.totalorder %s14, 0
    %p117 = por %p115, %p116
    %p118 = scmp.ne.s32.totalorder %s104, %s105
    %p119 = scmp.eq.s32.totalorder %s15, 1
    %p120 = por %p118, %p119
    %p122 = scmp.ne.s32.totalorder %s105, %s121
    %p123 = scmp.eq.s32.totalorder %s15, 0
    %p124 = por %p122, %p123
    %p125 = scmp.le.s32.totalorder 1, %s9
    %p126 = scmp.lt.s32.totalorder %s9, 3
    %p127 = pnand %p125, %p126
    %p128 = pneg %p127
    // Predicated region
    $region9: #{mb_seeder_forward.3} parent=5 // pred_check
      _
    $region10: #{mb_seeder_forward.3} parent=5 // pred_check_branch
      %130 = sbr.rel (%p127) target = $region12
    $region11: #{mb_seeder_forward.3} parent=5 // pred_region
      %s131 = ssub.s32 %s9, 1
      // Predicated region
      $region13: #{mb_seeder_forward.3} parent=11 // pred_check
        %p132 = pneg %p70
      $region14: #{mb_seeder_forward.3} parent=11 // pred_check_branch
        %134 = sbr.rel (%p132) target = $region16
      $region15: #{mb_seeder_forward.3} parent=11 // pred_region
        _
      $region16: #{mb_seeder_forward.3} parent=11 // pred_fallthru
        _
      // Predicated region
      $region17: #{mb_seeder_forward.3} parent=11 // pred_check
        %p135 = pneg %p91
      $region18: #{mb_seeder_forward.3} parent=11 // pred_check_branch
        %137 = sbr.rel (%p135) target = $region20
      $region19: #{mb_seeder_forward.3} parent=11 // pred_region
        _
      $region20: #{mb_seeder_forward.3} parent=11 // pred_fallthru
        _
    $region12: #{mb_seeder_forward.3} parent=5 // pred_fallthru
      _
    %p138 = scmp.lt.s32.totalorder %s9, 2
    // Predicated region
    $region21: #{mb_seeder_forward.3} parent=5 // pred_check
      %p139 = pneg %p138
    $region22: #{mb_seeder_forward.3} parent=5 // pred_check_branch
      %141 = sbr.rel (%p139) target = $region24
    $region23: #{mb_seeder_forward.3} parent=5 // pred_region
      // Predicated region
      $region25: #{mb_seeder_forward.3} parent=23 // pred_check
        %p142 = pneg %p43
      $region26: #{mb_seeder_forward.3} parent=23 // pred_check_branch
        %144 = sbr.rel (%p142) target = $region28
      $region27: #{mb_seeder_forward.3} parent=23 // pred_region
        %s145 = smul.u32 2, %s17
        %p146 = scmp.lt.s32.totalorder %s16, 1
        %s147 = scalar_select %p146, %s16, 1
        %p148 = scmp.lt.s32.totalorder %s145, 1
        %s149 = scalar_select %p148, %s145, 1
        %s150 = smul.addr %s147, 2
        %s151 = sadd.s32 %s149, %s150
        %s152 = scalar_lea.vmem %s0, %s151
        %s153 = smul.u32 2, %s17
      $region28: #{mb_seeder_forward.3} parent=23 // pred_fallthru
        _
    $region24: #{mb_seeder_forward.3} parent=5 // pred_fallthru
      _
    %p154 = scmp.le.s32.totalorder 1, %s9
    %p155 = scmp.lt.s32.totalorder %s9, 3
    %p156 = pnand %p154, %p155
    %p157 = pneg %p156
    // Predicated region
    $region29: #{mb_seeder_forward.3} parent=5 // pred_check
      _
    $region30: #{mb_seeder_forward.3} parent=5 // pred_check_branch
      %159 = sbr.rel (%p156) target = $region32
    $region31: #{mb_seeder_forward.3} parent=5 // pred_region
      %s160 = ssub.s32 %s9, 1
      %s161 = smul.u32 2, %s19
      %p162 = scmp.lt.s32.totalorder %s18, 1
      %s163 = scalar_select %p162, %s18, 1
      %p164 = scmp.lt.s32.totalorder %s161, 1
      %s165 = scalar_select %p164, %s161, 1
      %s166 = smul.addr %s163, 2
      %s167 = sadd.s32 %s165, %s166
      %s168 = scalar_lea.vmem %s0, %s167
      %p169 = pneg %p49
      %p170 = pneg %p46
      %p171 = pneg %p70
      %p172 = pneg %p67
      %p173 = pneg %p91
      %p174 = pneg %p88
      %p175 = pneg %p117
      %p176 = pneg %p114
      %p177 = scmp.lt.s32.totalorder %s18, 1
      %s178 = scalar_select %p177, %s18, 1
      %s179 = smul.addr %s178, 32
      %s180 = smul.addr %s179, 8
      %s181 = scalar_lea.vmem %s3, %s180
      %s182 = smul.u32 2, %s19
      %p183 = scmp.lt.s32.totalorder %s18, 1
      %s184 = scalar_select %p183, %s18, 1
      %p185 = scmp.lt.s32.totalorder %s182, 1
      %s186 = scalar_select %p185, %s182, 1
      %s187 = smul.addr %s184, 2
      %s188 = sadd.s32 %s186, %s187
      %s189 = scalar_lea.vmem %s0, %s188
      %s190 = smul.u32 2, %s19
      %p191 = scmp.lt.s32.totalorder %s18, 1
      %s192 = scalar_select %p191, %s18, 1
      %s193 = smul.addr %s192, 32
      %s194 = smul.addr %s193, 8
      %s195 = scalar_lea.vmem %s3, %s194
      %p196 = scmp.eq.s32.totalorder %s19, 0
      // Predicated region
      $region33: #{mb_seeder_forward.3} parent=31 // pred_check
        %p197 = pneg %p196
      $region34: #{mb_seeder_forward.3} parent=31 // pred_check_branch
        %199 = sbr.rel (%p197) target = $region36
      $region35: #{mb_seeder_forward.3} parent=31 // pred_region
        %200 = vst [vmem:[#allocation2] sm:$0xff] 0.0
        %201 = vst [vmem:[#allocation2 + $0x8] sm:$0xff] 0.0
        %202 = vst [vmem:[#allocation2 + $0x10] sm:$0xff] 0.0
        %203 = vst [vmem:[#allocation2 + $0x18] sm:$0xff] 0.0
        %204 = vst [vmem:[#allocation2 + $0x20] sm:$0xff] 0.0
        %205 = vst [vmem:[#allocation2 + $0x28] sm:$0xff] 0.0
        %206 = vst [vmem:[#allocation2 + $0x30] sm:$0xff] 0.0
        %207 = vst [vmem:[#allocation2 + $0x38] sm:$0xff] 0.0
        %208 = vst [vmem:[#allocation2 + $0x40] sm:$0xff] 0.0
        %209 = vst [vmem:[#allocation2 + $0x48] sm:$0xff] 0.0
        %210 = vst [vmem:[#allocation2 + $0x50] sm:$0xff] 0.0
        %211 = vst [vmem:[#allocation2 + $0x58] sm:$0xff] 0.0
        %212 = vst [vmem:[#allocation2 + $0x60] sm:$0xff] 0.0
        %213 = vst [vmem:[#allocation2 + $0x68] sm:$0xff] 0.0
        %214 = vst [vmem:[#allocation2 + $0x70] sm:$0xff] 0.0
        %215 = vst [vmem:[#allocation2 + $0x78] sm:$0xff] 0.0
        %216 = vst [vmem:[#allocation2 + $0x80] sm:$0xff] 0.0
        %217 = vst [vmem:[#allocation2 + $0x88] sm:$0xff] 0.0
        %218 = vst [vmem:[#allocation2 + $0x90] sm:$0xff] 0.0
        %219 = vst [vmem:[#allocation2 + $0x98] sm:$0xff] 0.0
        %220 = vst [vmem:[#allocation2 + $0xa0] sm:$0xff] 0.0
        %221 = vst [vmem:[#allocation2 + $0xa8] sm:$0xff] 0.0
        %222 = vst [vmem:[#allocation2 + $0xb0] sm:$0xff] 0.0
        %223 = vst [vmem:[#allocation2 + $0xb8] sm:$0xff] 0.0
        %224 = vst [vmem:[#allocation2 + $0xc0] sm:$0xff] 0.0
        %225 = vst [vmem:[#allocation2 + $0xc8] sm:$0xff] 0.0
        %226 = vst [vmem:[#allocation2 + $0xd0] sm:$0xff] 0.0
        %227 = vst [vmem:[#allocation2 + $0xd8] sm:$0xff] 0.0
        %228 = vst [vmem:[#allocation2 + $0xe0] sm:$0xff] 0.0
        %229 = vst [vmem:[#allocation2 + $0xe8] sm:$0xff] 0.0
        %230 = vst [vmem:[#allocation2 + $0xf0] sm:$0xff] 0.0
        %231 = vst [vmem:[#allocation2 + $0xf8] sm:$0xff] 0.0
      $region36: #{mb_seeder_forward.3} parent=31 // pred_fallthru
        _
      %v232 = vld [vmem:[%s189] sm:$0x3]
      %v233 = vmul.f32 %v232, 255.0
      %v234 = vfloor.f32 %v233
      %v235 = vld [vmem:[%s1] sm:$0xff]
      %v236 = vld [vmem:[%s1 + $0x8] sm:$0xff]
      %v237 = vld [vmem:[%s1 + $0x10] sm:$0xff]
      %v238 = vld [vmem:[%s1 + $0x18] sm:$0xff]
      %v239 = vld [vmem:[%s1 + $0x20] sm:$0xff]
      %v240 = vld [vmem:[%s1 + $0x28] sm:$0xff]
      %v241 = vld [vmem:[%s1 + $0x30] sm:$0xff]
      %v242 = vld [vmem:[%s1 + $0x38] sm:$0xff]
      %v243 = vld [vmem:[%s1 + $0x40] sm:$0xff]
      %v244 = vld [vmem:[%s1 + $0x48] sm:$0xff]
      %v245 = vld [vmem:[%s1 + $0x50] sm:$0xff]
      %v246 = vld [vmem:[%s1 + $0x58] sm:$0xff]
      %v247 = vld [vmem:[%s1 + $0x60] sm:$0xff]
      %v248 = vld [vmem:[%s1 + $0x68] sm:$0xff]
      %v249 = vld [vmem:[%s1 + $0x70] sm:$0xff]
      %v250 = vld [vmem:[%s1 + $0x78] sm:$0xff]
      %v251 = vld [vmem:[%s1 + $0x80] sm:$0xff]
      %v252 = vld [vmem:[%s1 + $0x88] sm:$0xff]
      %v253 = vld [vmem:[%s1 + $0x90] sm:$0xff]
      %v254 = vld [vmem:[%s1 + $0x98] sm:$0xff]
      %v255 = vld [vmem:[%s1 + $0xa0] sm:$0xff]
      %v256 = vld [vmem:[%s1 + $0xa8] sm:$0xff]
      %v257 = vld [vmem:[%s1 + $0xb0] sm:$0xff]
      %v258 = vld [vmem:[%s1 + $0xb8] sm:$0xff]
      %v259 = vld [vmem:[%s1 + $0xc0] sm:$0xff]
      %v260 = vld [vmem:[%s1 + $0xc8] sm:$0xff]
      %v261 = vld [vmem:[%s1 + $0xd0] sm:$0xff]
      %v262 = vld [vmem:[%s1 + $0xd8] sm:$0xff]
      %v263 = vld [vmem:[%s1 + $0xe0] sm:$0xff]
      %v264 = vld [vmem:[%s1 + $0xe8] sm:$0xff]
      %v265 = vld [vmem:[%s1 + $0xf0] sm:$0xff]
      %v266 = vld [vmem:[%s1 + $0xf8] sm:$0xff]
      %v267 = vld [vmem:[%s1 + $0x100] sm:$0xff]
      %v268 = vld [vmem:[%s1 + $0x108] sm:$0xff]
      %v269 = vld [vmem:[%s1 + $0x110] sm:$0xff]
      %v270 = vld [vmem:[%s1 + $0x118] sm:$0xff]
      %v271 = vld [vmem:[%s1 + $0x120] sm:$0xff]
      %v272 = vld [vmem:[%s1 + $0x128] sm:$0xff]
      %v273 = vld [vmem:[%s1 + $0x130] sm:$0xff]
      %v274 = vld [vmem:[%s1 + $0x138] sm:$0xff]
      %v275 = vld [vmem:[%s1 + $0x140] sm:$0xff]
      %v276 = vld [vmem:[%s1 + $0x148] sm:$0xff]
      %v277 = vld [vmem:[%s1 + $0x150] sm:$0xff]
      %v278 = vld [vmem:[%s1 + $0x158] sm:$0xff]
      %v279 = vld [vmem:[%s1 + $0x160] sm:$0xff]
      %v280 = vld [vmem:[%s1 + $0x168] sm:$0xff]
      %v281 = vld [vmem:[%s1 + $0x170] sm:$0xff]
      %v282 = vld [vmem:[%s1 + $0x178] sm:$0xff]
      %v283 = vld [vmem:[%s1 + $0x180] sm:$0xff]
      %v284 = vld [vmem:[%s1 + $0x188] sm:$0xff]
      %v285 = vld [vmem:[%s1 + $0x190] sm:$0xff]
      %v286 = vld [vmem:[%s1 + $0x198] sm:$0xff]
      %v287 = vld [vmem:[%s1 + $0x1a0] sm:$0xff]
      %v288 = vld [vmem:[%s1 + $0x1a8] sm:$0xff]
      %v289 = vld [vmem:[%s1 + $0x1b0] sm:$0xff]
      %v290 = vld [vmem:[%s1 + $0x1b8] sm:$0xff]
      %v291 = vld [vmem:[%s1 + $0x1c0] sm:$0xff]
      %v292 = vld [vmem:[%s1 + $0x1c8] sm:$0xff]
      %v293 = vld [vmem:[%s1 + $0x1d0] sm:$0xff]
      %v294 = vld [vmem:[%s1 + $0x1d8] sm:$0xff]
      %v295 = vld [vmem:[%s1 + $0x1e0] sm:$0xff]
      %v296 = vld [vmem:[%s1 + $0x1e8] sm:$0xff]
      %v297 = vld [vmem:[%s1 + $0x1f0] sm:$0xff]
      %v298 = vld [vmem:[%s1 + $0x1f8] sm:$0xff]
      %v300 = vperm.slane %v234, 0
      %v301 = vperm.slane %v234, 1
      %vm304 = vcmp.eq.f32.partialorder %v300, %v235
      %vm305 = vcmp.eq.f32.partialorder %v301, %v236
      %vm306 = vcmp.eq.f32.partialorder %v300, %v237
      %vm307 = vcmp.eq.f32.partialorder %v301, %v238
      %vm308 = vcmp.eq.f32.partialorder %v300, %v239
      %vm309 = vcmp.eq.f32.partialorder %v301, %v240
      %vm310 = vcmp.eq.f32.partialorder %v300, %v241
      %vm311 = vcmp.eq.f32.partialorder %v301, %v242
      %vm312 = vcmp.eq.f32.partialorder %v300, %v243
      %vm313 = vcmp.eq.f32.partialorder %v301, %v244
      %vm314 = vcmp.eq.f32.partialorder %v300, %v245
      %vm315 = vcmp.eq.f32.partialorder %v301, %v246
      %vm316 = vcmp.eq.f32.partialorder %v300, %v247
      %vm317 = vcmp.eq.f32.partialorder %v301, %v248
      %vm318 = vcmp.eq.f32.partialorder %v300, %v249
      %vm319 = vcmp.eq.f32.partialorder %v301, %v250
      %vm320 = vcmp.eq.f32.partialorder %v300, %v251
      %vm321 = vcmp.eq.f32.partialorder %v301, %v252
      %vm322 = vcmp.eq.f32.partialorder %v300, %v253
      %vm323 = vcmp.eq.f32.partialorder %v301, %v254
      %vm324 = vcmp.eq.f32.partialorder %v300, %v255
      %vm325 = vcmp.eq.f32.partialorder %v301, %v256
      %vm326 = vcmp.eq.f32.partialorder %v300, %v257
      %vm327 = vcmp.eq.f32.partialorder %v301, %v258
      %vm328 = vcmp.eq.f32.partialorder %v300, %v259
      %vm329 = vcmp.eq.f32.partialorder %v301, %v260
      %vm330 = vcmp.eq.f32.partialorder %v300, %v261
      %vm331 = vcmp.eq.f32.partialorder %v301, %v262
      %vm332 = vcmp.eq.f32.partialorder %v300, %v263
      %vm333 = vcmp.eq.f32.partialorder %v301, %v264
      %vm334 = vcmp.eq.f32.partialorder %v300, %v265
      %vm335 = vcmp.eq.f32.partialorder %v301, %v266
      %vm336 = vcmp.eq.f32.partialorder %v300, %v267
      %vm337 = vcmp.eq.f32.partialorder %v301, %v268
      %vm338 = vcmp.eq.f32.partialorder %v300, %v269
      %vm339 = vcmp.eq.f32.partialorder %v301, %v270
      %vm340 = vcmp.eq.f32.partialorder %v300, %v271
      %vm341 = vcmp.eq.f32.partialorder %v301, %v272
      %vm342 = vcmp.eq.f32.partialorder %v300, %v273
      %vm343 = vcmp.eq.f32.partialorder %v301, %v274
      %vm344 = vcmp.eq.f32.partialorder %v300, %v275
      %vm345 = vcmp.eq.f32.partialorder %v301, %v276
      %vm346 = vcmp.eq.f32.partialorder %v300, %v277
      %vm347 = vcmp.eq.f32.partialorder %v301, %v278
      %vm348 = vcmp.eq.f32.partialorder %v300, %v279
      %vm349 = vcmp.eq.f32.partialorder %v301, %v280
      %vm350 = vcmp.eq.f32.partialorder %v300, %v281
      %vm351 = vcmp.eq.f32.partialorder %v301, %v282
      %vm352 = vcmp.eq.f32.partialorder %v300, %v283
      %vm353 = vcmp.eq.f32.partialorder %v301, %v284
      %vm354 = vcmp.eq.f32.partialorder %v300, %v285
      %vm355 = vcmp.eq.f32.partialorder %v301, %v286
      %vm356 = vcmp.eq.f32.partialorder %v300, %v287
      %vm357 = vcmp.eq.f32.partialorder %v301, %v288
      %vm358 = vcmp.eq.f32.partialorder %v300, %v289
      %vm359 = vcmp.eq.f32.partialorder %v301, %v290
      %vm360 = vcmp.eq.f32.partialorder %v300, %v291
      %vm361 = vcmp.eq.f32.partialorder %v301, %v292
      %vm362 = vcmp.eq.f32.partialorder %v300, %v293
      %vm363 = vcmp.eq.f32.partialorder %v301, %v294
      %vm364 = vcmp.eq.f32.partialorder %v300, %v295
      %vm365 = vcmp.eq.f32.partialorder %v301, %v296
      %vm366 = vcmp.eq.f32.partialorder %v300, %v297
      %vm367 = vcmp.eq.f32.partialorder %v301, %v298
      %v368 = vsel %vm304, 1, 0
      %v369 = vsel %vm305, 1, 0
      %v370 = vsel %vm306, 1, 0
      %v371 = vsel %vm307, 1, 0
      %v372 = vsel %vm308, 1, 0
      %v373 = vsel %vm309, 1, 0
      %v374 = vsel %vm310, 1, 0
      %v375 = vsel %vm311, 1, 0
      %v376 = vsel %vm312, 1, 0
      %v377 = vsel %vm313, 1, 0
      %v378 = vsel %vm314, 1, 0
      %v379 = vsel %vm315, 1, 0
      %v380 = vsel %vm316, 1, 0
      %v381 = vsel %vm317, 1, 0
      %v382 = vsel %vm318, 1, 0
      %v383 = vsel %vm319, 1, 0
      %v384 = vsel %vm320, 1, 0
      %v385 = vsel %vm321, 1, 0
      %v386 = vsel %vm322, 1, 0
      %v387 = vsel %vm323, 1, 0
      %v388 = vsel %vm324, 1, 0
      %v389 = vsel %vm325, 1, 0
      %v390 = vsel %vm326, 1, 0
      %v391 = vsel %vm327, 1, 0
      %v392 = vsel %vm328, 1, 0
      %v393 = vsel %vm329, 1, 0
      %v394 = vsel %vm330, 1, 0
      %v395 = vsel %vm331, 1, 0
      %v396 = vsel %vm332, 1, 0
      %v397 = vsel %vm333, 1, 0
      %v398 = vsel %vm334, 1, 0
      %v399 = vsel %vm335, 1, 0
      %v400 = vsel %vm336, 1, 0
      %v401 = vsel %vm337, 1, 0
      %v402 = vsel %vm338, 1, 0
      %v403 = vsel %vm339, 1, 0
      %v404 = vsel %vm340, 1, 0
      %v405 = vsel %vm341, 1, 0
      %v406 = vsel %vm342, 1, 0
      %v407 = vsel %vm343, 1, 0
      %v408 = vsel %vm344, 1, 0
      %v409 = vsel %vm345, 1, 0
      %v410 = vsel %vm346, 1, 0
      %v411 = vsel %vm347, 1, 0
      %v412 = vsel %vm348, 1, 0
      %v413 = vsel %vm349, 1, 0
      %v414 = vsel %vm350, 1, 0
      %v415 = vsel %vm351, 1, 0
      %v416 = vsel %vm352, 1, 0
      %v417 = vsel %vm353, 1, 0
      %v418 = vsel %vm354, 1, 0
      %v419 = vsel %vm355, 1, 0
      %v420 = vsel %vm356, 1, 0
      %v421 = vsel %vm357, 1, 0
      %v422 = vsel %vm358, 1, 0
      %v423 = vsel %vm359, 1, 0
      %v424 = vsel %vm360, 1, 0
      %v425 = vsel %vm361, 1, 0
      %v426 = vsel %vm362, 1, 0
      %v427 = vsel %vm363, 1, 0
      %v428 = vsel %vm364, 1, 0
      %v429 = vsel %vm365, 1, 0
      %v430 = vsel %vm366, 1, 0
      %v431 = vsel %vm367, 1, 0
      %v432 = vcvt.s32.f32 %v368
      %v433 = vcvt.s32.f32 %v369
      %v434 = vcvt.s32.f32 %v370
      %v435 = vcvt.s32.f32 %v371
      %v436 = vcvt.s32.f32 %v372
      %v437 = vcvt.s32.f32 %v373
      %v438 = vcvt.s32.f32 %v374
      %v439 = vcvt.s32.f32 %v375
      %v440 = vcvt.s32.f32 %v376
      %v441 = vcvt.s32.f32 %v377
      %v442 = vcvt.s32.f32 %v378
      %v443 = vcvt.s32.f32 %v379
      %v444 = vcvt.s32.f32 %v380
      %v445 = vcvt.s32.f32 %v381
      %v446 = vcvt.s32.f32 %v382
      %v447 = vcvt.s32.f32 %v383
      %v448 = vcvt.s32.f32 %v384
      %v449 = vcvt.s32.f32 %v385
      %v450 = vcvt.s32.f32 %v386
      %v451 = vcvt.s32.f32 %v387
      %v452 = vcvt.s32.f32 %v388
      %v453 = vcvt.s32.f32 %v389
      %v454 = vcvt.s32.f32 %v390
      %v455 = vcvt.s32.f32 %v391
      %v456 = vcvt.s32.f32 %v392
      %v457 = vcvt.s32.f32 %v393
      %v458 = vcvt.s32.f32 %v394
      %v459 = vcvt.s32.f32 %v395
      %v460 = vcvt.s32.f32 %v396
      %v461 = vcvt.s32.f32 %v397
      %v462 = vcvt.s32.f32 %v398
      %v463 = vcvt.s32.f32 %v399
      %v464 = vcvt.s32.f32 %v400
      %v465 = vcvt.s32.f32 %v401
      %v466 = vcvt.s32.f32 %v402
      %v467 = vcvt.s32.f32 %v403
      %v468 = vcvt.s32.f32 %v404
      %v469 = vcvt.s32.f32 %v405
      %v470 = vcvt.s32.f32 %v406
      %v471 = vcvt.s32.f32 %v407
      %v472 = vcvt.s32.f32 %v408
      %v473 = vcvt.s32.f32 %v409
      %v474 = vcvt.s32.f32 %v410
      %v475 = vcvt.s32.f32 %v411
      %v476 = vcvt.s32.f32 %v412
      %v477 = vcvt.s32.f32 %v413
      %v478 = vcvt.s32.f32 %v414
      %v479 = vcvt.s32.f32 %v415
      %v480 = vcvt.s32.f32 %v416
      %v481 = vcvt.s32.f32 %v417
      %v482 = vcvt.s32.f32 %v418
      %v483 = vcvt.s32.f32 %v419
      %v484 = vcvt.s32.f32 %v420
      %v485 = vcvt.s32.f32 %v421
      %v486 = vcvt.s32.f32 %v422
      %v487 = vcvt.s32.f32 %v423
      %v488 = vcvt.s32.f32 %v424
      %v489 = vcvt.s32.f32 %v425
      %v490 = vcvt.s32.f32 %v426
      %v491 = vcvt.s32.f32 %v427
      %v492 = vcvt.s32.f32 %v428
      %v493 = vcvt.s32.f32 %v429
      %v494 = vcvt.s32.f32 %v430
      %v495 = vcvt.s32.f32 %v431
      %v496 = vpack.c.bf16 %v434, %v432
      %v497 = vpack.c.bf16 %v435, %v433
      %v498 = vpack.c.bf16 %v438, %v436
      %v499 = vpack.c.bf16 %v439, %v437
      %v500 = vpack.c.bf16 %v442, %v440
      %v501 = vpack.c.bf16 %v443, %v441
      %v502 = vpack.c.bf16 %v446, %v444
      %v503 = vpack.c.bf16 %v447, %v445
      %v504 = vpack.c.bf16 %v450, %v448
      %v505 = vpack.c.bf16 %v451, %v449
      %v506 = vpack.c.bf16 %v454, %v452
      %v507 = vpack.c.bf16 %v455, %v453
      %v508 = vpack.c.bf16 %v458, %v456
      %v509 = vpack.c.bf16 %v459, %v457
      %v510 = vpack.c.bf16 %v462, %v460
      %v511 = vpack.c.bf16 %v463, %v461
      %v512 = vpack.c.bf16 %v466, %v464
      %v513 = vpack.c.bf16 %v467, %v465
      %v514 = vpack.c.bf16 %v470, %v468
      %v515 = vpack.c.bf16 %v471, %v469
      %v516 = vpack.c.bf16 %v474, %v472
      %v517 = vpack.c.bf16 %v475, %v473
      %v518 = vpack.c.bf16 %v478, %v476
      %v519 = vpack.c.bf16 %v479, %v477
      %v520 = vpack.c.bf16 %v482, %v480
      %v521 = vpack.c.bf16 %v483, %v481
      %v522 = vpack.c.bf16 %v486, %v484
      %v523 = vpack.c.bf16 %v487, %v485
      %v524 = vpack.c.bf16 %v490, %v488
      %v525 = vpack.c.bf16 %v491, %v489
      %v526 = vpack.c.bf16 %v494, %v492
      %v527 = vpack.c.bf16 %v495, %v493
      %v528 = vld [vmem:[#allocation2] sm:$0xff]
      %v529 = vld [vmem:[#allocation2 + $0x8] sm:$0xff]
      %v530 = vld [vmem:[#allocation2 + $0x10] sm:$0xff]
      %v531 = vld [vmem:[#allocation2 + $0x18] sm:$0xff]
      %v532 = vld [vmem:[#allocation2 + $0x20] sm:$0xff]
      %v533 = vld [vmem:[#allocation2 + $0x28] sm:$0xff]
      %v534 = vld [vmem:[#allocation2 + $0x30] sm:$0xff]
      %v535 = vld [vmem:[#allocation2 + $0x38] sm:$0xff]
      %v536 = vld [vmem:[#allocation2 + $0x40] sm:$0xff]
      %v537 = vld [vmem:[#allocation2 + $0x48] sm:$0xff]
      %v538 = vld [vmem:[#allocation2 + $0x50] sm:$0xff]
      %v539 = vld [vmem:[#allocation2 + $0x58] sm:$0xff]
      %v540 = vld [vmem:[#allocation2 + $0x60] sm:$0xff]
      %v541 = vld [vmem:[#allocation2 + $0x68] sm:$0xff]
      %v542 = vld [vmem:[#allocation2 + $0x70] sm:$0xff]
      %v543 = vld [vmem:[#allocation2 + $0x78] sm:$0xff]
      %v544 = vld [vmem:[#allocation2 + $0x80] sm:$0xff]
      %v545 = vld [vmem:[#allocation2 + $0x88] sm:$0xff]
      %v546 = vld [vmem:[#allocation2 + $0x90] sm:$0xff]
      %v547 = vld [vmem:[#allocation2 + $0x98] sm:$0xff]
      %v548 = vld [vmem:[#allocation2 + $0xa0] sm:$0xff]
      %v549 = vld [vmem:[#allocation2 + $0xa8] sm:$0xff]
      %v550 = vld [vmem:[#allocation2 + $0xb0] sm:$0xff]
      %v551 = vld [vmem:[#allocation2 + $0xb8] sm:$0xff]
      %v552 = vld [vmem:[#allocation2 + $0xc0] sm:$0xff]
      %v553 = vld [vmem:[#allocation2 + $0xc8] sm:$0xff]
      %v554 = vld [vmem:[#allocation2 + $0xd0] sm:$0xff]
      %v555 = vld [vmem:[#allocation2 + $0xd8] sm:$0xff]
      %v556 = vld [vmem:[#allocation2 + $0xe0] sm:$0xff]
      %v557 = vld [vmem:[#allocation2 + $0xe8] sm:$0xff]
      %v558 = vld [vmem:[#allocation2 + $0xf0] sm:$0xff]
      %v559 = vld [vmem:[#allocation2 + $0xf8] sm:$0xff]
      %v560 = vld [vmem:[%s2] sm:$0xf]
      %v561 = vld [vmem:[%s2 + $0x4] sm:$0xf]
      %v562 = vld [vmem:[%s2 + $0x8] sm:$0xf]
      %v563 = vld [vmem:[%s2 + $0xc] sm:$0xf]
      %v564 = vld [vmem:[%s2 + $0x10] sm:$0xf]
      %v565 = vld [vmem:[%s2 + $0x14] sm:$0xf]
      %v566 = vld [vmem:[%s2 + $0x18] sm:$0xf]
      %v567 = vld [vmem:[%s2 + $0x1c] sm:$0xf]
      %v568 = vld [vmem:[%s2 + $0x20] sm:$0xf]
      %v569 = vld [vmem:[%s2 + $0x24] sm:$0xf]
      %v570 = vld [vmem:[%s2 + $0x28] sm:$0xf]
      %v571 = vld [vmem:[%s2 + $0x2c] sm:$0xf]
      %v572 = vld [vmem:[%s2 + $0x30] sm:$0xf]
      %v573 = vld [vmem:[%s2 + $0x34] sm:$0xf]
      %v574 = vld [vmem:[%s2 + $0x38] sm:$0xf]
      %v575 = vld [vmem:[%s2 + $0x3c] sm:$0xf]
      %v576 = vld [vmem:[%s2 + $0x40] sm:$0xf]
      %v577 = vld [vmem:[%s2 + $0x44] sm:$0xf]
      %v578 = vld [vmem:[%s2 + $0x48] sm:$0xf]
      %v579 = vld [vmem:[%s2 + $0x4c] sm:$0xf]
      %v580 = vld [vmem:[%s2 + $0x50] sm:$0xf]
      %v581 = vld [vmem:[%s2 + $0x54] sm:$0xf]
      %v582 = vld [vmem:[%s2 + $0x58] sm:$0xf]
      %v583 = vld [vmem:[%s2 + $0x5c] sm:$0xf]
      %v584 = vld [vmem:[%s2 + $0x60] sm:$0xf]
      %v585 = vld [vmem:[%s2 + $0x64] sm:$0xf]
      %v586 = vld [vmem:[%s2 + $0x68] sm:$0xf]
      %v587 = vld [vmem:[%s2 + $0x6c] sm:$0xf]
      %v588 = vld [vmem:[%s2 + $0x70] sm:$0xf]
      %v589 = vld [vmem:[%s2 + $0x74] sm:$0xf]
      %v590 = vld [vmem:[%s2 + $0x78] sm:$0xf]
      %v591 = vld [vmem:[%s2 + $0x7c] sm:$0xf]
      %v624 = vunpack.c.l.b16 %v560
      %v625 = vunpack.c.l.b16 %v561
      %v626 = vunpack.c.l.b16 %v562
      %v627 = vunpack.c.l.b16 %v563
      %v628 = vunpack.c.l.b16 %v564
      %v629 = vunpack.c.l.b16 %v565
      %v630 = vunpack.c.l.b16 %v566
      %v631 = vunpack.c.l.b16 %v567
      %v632 = vunpack.c.l.b16 %v568
      %v633 = vunpack.c.l.b16 %v569
      %v634 = vunpack.c.l.b16 %v570
      %v635 = vunpack.c.l.b16 %v571
      %v636 = vunpack.c.l.b16 %v572
      %v637 = vunpack.c.l.b16 %v573
      %v638 = vunpack.c.l.b16 %v574
      %v639 = vunpack.c.l.b16 %v575
      %v640 = vunpack.c.l.b16 %v576
      %v641 = vunpack.c.l.b16 %v577
      %v642 = vunpack.c.l.b16 %v578
      %v643 = vunpack.c.l.b16 %v579
      %v644 = vunpack.c.l.b16 %v580
      %v645 = vunpack.c.l.b16 %v581
      %v646 = vunpack.c.l.b16 %v582
      %v647 = vunpack.c.l.b16 %v583
      %v648 = vunpack.c.l.b16 %v584
      %v649 = vunpack.c.l.b16 %v585
      %v650 = vunpack.c.l.b16 %v586
      %v651 = vunpack.c.l.b16 %v587
      %v652 = vunpack.c.l.b16 %v588
      %v653 = vunpack.c.l.b16 %v589
      %v654 = vunpack.c.l.b16 %v590
      %v655 = vunpack.c.l.b16 %v591
      %v656 = vpack.c.b16 %v625, %v624
      %v657 = vpack.c.b16 %v627, %v626
      %v658 = vpack.c.b16 %v629, %v628
      %v659 = vpack.c.b16 %v631, %v630
      %v660 = vpack.c.b16 %v633, %v632
      %v661 = vpack.c.b16 %v635, %v634
      %v662 = vpack.c.b16 %v637, %v636
      %v663 = vpack.c.b16 %v639, %v638
      %v664 = vpack.c.b16 %v641, %v640
      %v665 = vpack.c.b16 %v643, %v642
      %v666 = vpack.c.b16 %v645, %v644
      %v667 = vpack.c.b16 %v647, %v646
      %v668 = vpack.c.b16 %v649, %v648
      %v669 = vpack.c.b16 %v651, %v650
      %v670 = vpack.c.b16 %v653, %v652
      %v671 = vpack.c.b16 %v655, %v654
      %688 = vmatpush.bf16.msra.mxu0 %v663
      %689 = vmatpush.bf16.msra.mxu0 %v662
      %690 = vmatpush.bf16.msra.mxu0 %v661
      %691 = vmatpush.bf16.msra.mxu0 %v660
      %692 = vmatpush.bf16.msra.mxu0 %v659
      %693 = vmatpush.bf16.msra.mxu0 %v658
      %694 = vmatpush.bf16.msra.mxu0 %v657
      %695 = vmatpush.bf16.msra.mxu0 %v656
      %696 = vmatmul.bf16.gmra.mxu0 %v496
      %v697 = vpop.f32.mrf.mxu0
      %v698 = vadd.f32 0.0, %v697
      %v699 = vpop.f32.mrf.mxu0
      %v700 = vadd.f32 0.0, %v699
      %701 = vmatmul.bf16.gmra.mxu0 %v498
      %v702 = vpop.f32.mrf.mxu0
      %v703 = vadd.f32 0.0, %v702
      %v704 = vpop.f32.mrf.mxu0
      %v705 = vadd.f32 0.0, %v704
      %706 = vmatmul.bf16.gmra.mxu0 %v500
      %v707 = vpop.f32.mrf.mxu0
      %v708 = vadd.f32 0.0, %v707
      %v709 = vpop.f32.mrf.mxu0
      %v710 = vadd.f32 0.0, %v709
      %711 = vmatmul.bf16.gmra.mxu0 %v502
      %v712 = vpop.f32.mrf.mxu0
      %v713 = vadd.f32 0.0, %v712
      %v714 = vpop.f32.mrf.mxu0
      %v715 = vadd.f32 0.0, %v714
      %716 = vmatmul.bf16.gmra.mxu0 %v504
      %v717 = vpop.f32.mrf.mxu0
      %v718 = vadd.f32 0.0, %v717
      %v719 = vpop.f32.mrf.mxu0
      %v720 = vadd.f32 0.0, %v719
      %721 = vmatmul.bf16.gmra.mxu0 %v506
      %v722 = vpop.f32.mrf.mxu0
      %v723 = vadd.f32 0.0, %v722
      %v724 = vpop.f32.mrf.mxu0
      %v725 = vadd.f32 0.0, %v724
      %726 = vmatmul.bf16.gmra.mxu0 %v508
      %v727 = vpop.f32.mrf.mxu0
      %v728 = vadd.f32 0.0, %v727
      %v729 = vpop.f32.mrf.mxu0
      %v730 = vadd.f32 0.0, %v729
      %731 = vmatmul.bf16.gmra.mxu0 %v510
      %v732 = vpop.f32.mrf.mxu0
      %v733 = vadd.f32 0.0, %v732
      %v734 = vpop.f32.mrf.mxu0
      %v735 = vadd.f32 0.0, %v734
      %736 = vmatmul.bf16.gmra.mxu0 %v512
      %v737 = vpop.f32.mrf.mxu0
      %v738 = vadd.f32 0.0, %v737
      %v739 = vpop.f32.mrf.mxu0
      %v740 = vadd.f32 0.0, %v739
      %741 = vmatmul.bf16.gmra.mxu0 %v514
      %v742 = vpop.f32.mrf.mxu0
      %v743 = vadd.f32 0.0, %v742
      %v744 = vpop.f32.mrf.mxu0
      %v745 = vadd.f32 0.0, %v744
      %746 = vmatmul.bf16.gmra.mxu0 %v516
      %v747 = vpop.f32.mrf.mxu0
      %v748 = vadd.f32 0.0, %v747
      %v749 = vpop.f32.mrf.mxu0
      %v750 = vadd.f32 0.0, %v749
      %751 = vmatmul.bf16.gmra.mxu0 %v518
      %v752 = vpop.f32.mrf.mxu0
      %v753 = vadd.f32 0.0, %v752
      %v754 = vpop.f32.mrf.mxu0
      %v755 = vadd.f32 0.0, %v754
      %756 = vmatmul.bf16.gmra.mxu0 %v520
      %v757 = vpop.f32.mrf.mxu0
      %v758 = vadd.f32 0.0, %v757
      %v759 = vpop.f32.mrf.mxu0
      %v760 = vadd.f32 0.0, %v759
      %761 = vmatmul.bf16.gmra.mxu0 %v522
      %v762 = vpop.f32.mrf.mxu0
      %v763 = vadd.f32 0.0, %v762
      %v764 = vpop.f32.mrf.mxu0
      %v765 = vadd.f32 0.0, %v764
      %766 = vmatmul.bf16.gmra.mxu0 %v524
      %v767 = vpop.f32.mrf.mxu0
      %v768 = vadd.f32 0.0, %v767
      %v769 = vpop.f32.mrf.mxu0
      %v770 = vadd.f32 0.0, %v769
      %771 = vmatmul.bf16.gmra.mxu0 %v526
      %v772 = vpop.f32.mrf.mxu0
      %v773 = vadd.f32 0.0, %v772
      %v774 = vpop.f32.mrf.mxu0
      %v775 = vadd.f32 0.0, %v774
      %776 = vdwg.mxu0
      %777 = vmatpush.bf16.msra.mxu0 %v671
      %778 = vmatpush.bf16.msra.mxu0 %v670
      %779 = vmatpush.bf16.msra.mxu0 %v669
      %780 = vmatpush.bf16.msra.mxu0 %v668
      %781 = vmatpush.bf16.msra.mxu0 %v667
      %782 = vmatpush.bf16.msra.mxu0 %v666
      %783 = vmatpush.bf16.msra.mxu0 %v665
      %784 = vmatpush.bf16.msra.mxu0 %v664
      %785 = vmatmul.bf16.gmra.mxu0 %v497
      %v786 = vpop.f32.mrf.mxu0
      %v787 = vadd.f32 %v698, %v786
      %v788 = vpop.f32.mrf.mxu0
      %v789 = vadd.f32 %v700, %v788
      %790 = vmatmul.bf16.gmra.mxu0 %v499
      %v791 = vpop.f32.mrf.mxu0
      %v792 = vadd.f32 %v703, %v791
      %v793 = vpop.f32.mrf.mxu0
      %v794 = vadd.f32 %v705, %v793
      %795 = vmatmul.bf16.gmra.mxu0 %v501
      %v796 = vpop.f32.mrf.mxu0
      %v797 = vadd.f32 %v708, %v796
      %v798 = vpop.f32.mrf.mxu0
      %v799 = vadd.f32 %v710, %v798
      %800 = vmatmul.bf16.gmra.mxu0 %v503
      %v801 = vpop.f32.mrf.mxu0
      %v802 = vadd.f32 %v713, %v801
      %v803 = vpop.f32.mrf.mxu0
      %v804 = vadd.f32 %v715, %v803
      %805 = vmatmul.bf16.gmra.mxu0 %v505
      %v806 = vpop.f32.mrf.mxu0
      %v807 = vadd.f32 %v718, %v806
      %v808 = vpop.f32.mrf.mxu0
      %v809 = vadd.f32 %v720, %v808
      %810 = vmatmul.bf16.gmra.mxu0 %v507
      %v811 = vpop.f32.mrf.mxu0
      %v812 = vadd.f32 %v723, %v811
      %v813 = vpop.f32.mrf.mxu0
      %v814 = vadd.f32 %v725, %v813
      %815 = vmatmul.bf16.gmra.mxu0 %v509
      %v816 = vpop.f32.mrf.mxu0
      %v817 = vadd.f32 %v728, %v816
      %v818 = vpop.f32.mrf.mxu0
      %v819 = vadd.f32 %v730, %v818
      %820 = vmatmul.bf16.gmra.mxu0 %v511
      %v821 = vpop.f32.mrf.mxu0
      %v822 = vadd.f32 %v733, %v821
      %v823 = vpop.f32.mrf.mxu0
      %v824 = vadd.f32 %v735, %v823
      %825 = vmatmul.bf16.gmra.mxu0 %v513
      %v826 = vpop.f32.mrf.mxu0
      %v827 = vadd.f32 %v738, %v826
      %v828 = vpop.f32.mrf.mxu0
      %v829 = vadd.f32 %v740, %v828
      %830 = vmatmul.bf16.gmra.mxu0 %v515
      %v831 = vpop.f32.mrf.mxu0
      %v832 = vadd.f32 %v743, %v831
      %v833 = vpop.f32.mrf.mxu0
      %v834 = vadd.f32 %v745, %v833
      %835 = vmatmul.bf16.gmra.mxu0 %v517
      %v836 = vpop.f32.mrf.mxu0
      %v837 = vadd.f32 %v748, %v836
      %v838 = vpop.f32.mrf.mxu0
      %v839 = vadd.f32 %v750, %v838
      %840 = vmatmul.bf16.gmra.mxu0 %v519
      %v841 = vpop.f32.mrf.mxu0
      %v842 = vadd.f32 %v753, %v841
      %v843 = vpop.f32.mrf.mxu0
      %v844 = vadd.f32 %v755, %v843
      %845 = vmatmul.bf16.gmra.mxu0 %v521
      %v846 = vpop.f32.mrf.mxu0
      %v847 = vadd.f32 %v758, %v846
      %v848 = vpop.f32.mrf.mxu0
      %v849 = vadd.f32 %v760, %v848
      %850 = vmatmul.bf16.gmra.mxu0 %v523
      %v851 = vpop.f32.mrf.mxu0
      %v852 = vadd.f32 %v763, %v851
      %v853 = vpop.f32.mrf.mxu0
      %v854 = vadd.f32 %v765, %v853
      %855 = vmatmul.bf16.gmra.mxu0 %v525
      %v856 = vpop.f32.mrf.mxu0
      %v857 = vadd.f32 %v768, %v856
      %v858 = vpop.f32.mrf.mxu0
      %v859 = vadd.f32 %v770, %v858
      %860 = vmatmul.bf16.gmra.mxu0 %v527
      %v861 = vpop.f32.mrf.mxu0
      %v862 = vadd.f32 %v773, %v861
      %v863 = vpop.f32.mrf.mxu0
      %v864 = vadd.f32 %v775, %v863
      %865 = vdwg.mxu0
      %v866 = vadd.f32 %v528, %v787
      %v867 = vadd.f32 %v529, %v789
      %v868 = vadd.f32 %v530, %v792
      %v869 = vadd.f32 %v531, %v794
      %v870 = vadd.f32 %v532, %v797
      %v871 = vadd.f32 %v533, %v799
      %v872 = vadd.f32 %v534, %v802
      %v873 = vadd.f32 %v535, %v804
      %v874 = vadd.f32 %v536, %v807
      %v875 = vadd.f32 %v537, %v809
      %v876 = vadd.f32 %v538, %v812
      %v877 = vadd.f32 %v539, %v814
      %v878 = vadd.f32 %v540, %v817
      %v879 = vadd.f32 %v541, %v819
      %v880 = vadd.f32 %v542, %v822
      %v881 = vadd.f32 %v543, %v824
      %v882 = vadd.f32 %v544, %v827
      %v883 = vadd.f32 %v545, %v829
      %v884 = vadd.f32 %v546, %v832
      %v885 = vadd.f32 %v547, %v834
      %v886 = vadd.f32 %v548, %v837
      %v887 = vadd.f32 %v549, %v839
      %v888 = vadd.f32 %v550, %v842
      %v889 = vadd.f32 %v551, %v844
      %v890 = vadd.f32 %v552, %v847
      %v891 = vadd.f32 %v553, %v849
      %v892 = vadd.f32 %v554, %v852
      %v893 = vadd.f32 %v555, %v854
      %v894 = vadd.f32 %v556, %v857
      %v895 = vadd.f32 %v557, %v859
      %v896 = vadd.f32 %v558, %v862
      %v897 = vadd.f32 %v559, %v864
      %898 = vst [vmem:[#allocation2] sm:$0xff] %v866
      %899 = vst [vmem:[#allocation2 + $0x8] sm:$0xff] %v867
      %900 = vst [vmem:[#allocation2 + $0x10] sm:$0xff] %v868
      %901 = vst [vmem:[#allocation2 + $0x18] sm:$0xff] %v869
      %902 = vst [vmem:[#allocation2 + $0x20] sm:$0xff] %v870
      %903 = vst [vmem:[#allocation2 + $0x28] sm:$0xff] %v871
      %904 = vst [vmem:[#allocation2 + $0x30] sm:$0xff] %v872
      %905 = vst [vmem:[#allocation2 + $0x38] sm:$0xff] %v873
      %906 = vst [vmem:[#allocation2 + $0x40] sm:$0xff] %v874
      %907 = vst [vmem:[#allocation2 + $0x48] sm:$0xff] %v875
      %908 = vst [vmem:[#allocation2 + $0x50] sm:$0xff] %v876
      %909 = vst [vmem:[#allocation2 + $0x58] sm:$0xff] %v877
      %910 = vst [vmem:[#allocation2 + $0x60] sm:$0xff] %v878
      %911 = vst [vmem:[#allocation2 + $0x68] sm:$0xff] %v879
      %912 = vst [vmem:[#allocation2 + $0x70] sm:$0xff] %v880
      %913 = vst [vmem:[#allocation2 + $0x78] sm:$0xff] %v881
      %914 = vst [vmem:[#allocation2 + $0x80] sm:$0xff] %v882
      %915 = vst [vmem:[#allocation2 + $0x88] sm:$0xff] %v883
      %916 = vst [vmem:[#allocation2 + $0x90] sm:$0xff] %v884
      %917 = vst [vmem:[#allocation2 + $0x98] sm:$0xff] %v885
      %918 = vst [vmem:[#allocation2 + $0xa0] sm:$0xff] %v886
      %919 = vst [vmem:[#allocation2 + $0xa8] sm:$0xff] %v887
      %920 = vst [vmem:[#allocation2 + $0xb0] sm:$0xff] %v888
      %921 = vst [vmem:[#allocation2 + $0xb8] sm:$0xff] %v889
      %922 = vst [vmem:[#allocation2 + $0xc0] sm:$0xff] %v890
      %923 = vst [vmem:[#allocation2 + $0xc8] sm:$0xff] %v891
      %924 = vst [vmem:[#allocation2 + $0xd0] sm:$0xff] %v892
      %925 = vst [vmem:[#allocation2 + $0xd8] sm:$0xff] %v893
      %926 = vst [vmem:[#allocation2 + $0xe0] sm:$0xff] %v894
      %927 = vst [vmem:[#allocation2 + $0xe8] sm:$0xff] %v895
      %928 = vst [vmem:[#allocation2 + $0xf0] sm:$0xff] %v896
      %929 = vst [vmem:[#allocation2 + $0xf8] sm:$0xff] %v897
      // Predicated region
      $region37: #{mb_seeder_forward.3} parent=31 // pred_check
        %p930 = pneg %p196
      $region38: #{mb_seeder_forward.3} parent=31 // pred_check_branch
        %932 = sbr.rel (%p930) target = $region40
      $region39: #{mb_seeder_forward.3} parent=31 // pred_region
        %v933 = vld [vmem:[#allocation2] sm:$0xff]
        %v934 = vld [vmem:[#allocation2 + $0x8] sm:$0xff]
        %v935 = vld [vmem:[#allocation2 + $0x10] sm:$0xff]
        %v936 = vld [vmem:[#allocation2 + $0x18] sm:$0xff]
        %v937 = vld [vmem:[#allocation2 + $0x20] sm:$0xff]
        %v938 = vld [vmem:[#allocation2 + $0x28] sm:$0xff]
        %v939 = vld [vmem:[#allocation2 + $0x30] sm:$0xff]
        %v940 = vld [vmem:[#allocation2 + $0x38] sm:$0xff]
        %v941 = vld [vmem:[#allocation2 + $0x40] sm:$0xff]
        %v942 = vld [vmem:[#allocation2 + $0x48] sm:$0xff]
        %v943 = vld [vmem:[#allocation2 + $0x50] sm:$0xff]
        %v944 = vld [vmem:[#allocation2 + $0x58] sm:$0xff]
        %v945 = vld [vmem:[#allocation2 + $0x60] sm:$0xff]
        %v946 = vld [vmem:[#allocation2 + $0x68] sm:$0xff]
        %v947 = vld [vmem:[#allocation2 + $0x70] sm:$0xff]
        %v948 = vld [vmem:[#allocation2 + $0x78] sm:$0xff]
        %v949 = vld [vmem:[#allocation2 + $0x80] sm:$0xff]
        %v950 = vld [vmem:[#allocation2 + $0x88] sm:$0xff]
        %v951 = vld [vmem:[#allocation2 + $0x90] sm:$0xff]
        %v952 = vld [vmem:[#allocation2 + $0x98] sm:$0xff]
        %v953 = vld [vmem:[#allocation2 + $0xa0] sm:$0xff]
        %v954 = vld [vmem:[#allocation2 + $0xa8] sm:$0xff]
        %v955 = vld [vmem:[#allocation2 + $0xb0] sm:$0xff]
        %v956 = vld [vmem:[#allocation2 + $0xb8] sm:$0xff]
        %v957 = vld [vmem:[#allocation2 + $0xc0] sm:$0xff]
        %v958 = vld [vmem:[#allocation2 + $0xc8] sm:$0xff]
        %v959 = vld [vmem:[#allocation2 + $0xd0] sm:$0xff]
        %v960 = vld [vmem:[#allocation2 + $0xd8] sm:$0xff]
        %v961 = vld [vmem:[#allocation2 + $0xe0] sm:$0xff]
        %v962 = vld [vmem:[#allocation2 + $0xe8] sm:$0xff]
        %v963 = vld [vmem:[#allocation2 + $0xf0] sm:$0xff]
        %v964 = vld [vmem:[#allocation2 + $0xf8] sm:$0xff]
        %965 = vst [vmem:[%s195] sm:$0xff] %v933
        %966 = vst [vmem:[%s195 + $0x8] sm:$0xff] %v934
        %967 = vst [vmem:[%s195 + $0x10] sm:$0xff] %v935
        %968 = vst [vmem:[%s195 + $0x18] sm:$0xff] %v936
        %969 = vst [vmem:[%s195 + $0x20] sm:$0xff] %v937
        %970 = vst [vmem:[%s195 + $0x28] sm:$0xff] %v938
        %971 = vst [vmem:[%s195 + $0x30] sm:$0xff] %v939
        %972 = vst [vmem:[%s195 + $0x38] sm:$0xff] %v940
        %973 = vst [vmem:[%s195 + $0x40] sm:$0xff] %v941
        %974 = vst [vmem:[%s195 + $0x48] sm:$0xff] %v942
        %975 = vst [vmem:[%s195 + $0x50] sm:$0xff] %v943
        %976 = vst [vmem:[%s195 + $0x58] sm:$0xff] %v944
        %977 = vst [vmem:[%s195 + $0x60] sm:$0xff] %v945
        %978 = vst [vmem:[%s195 + $0x68] sm:$0xff] %v946
        %979 = vst [vmem:[%s195 + $0x70] sm:$0xff] %v947
        %980 = vst [vmem:[%s195 + $0x78] sm:$0xff] %v948
        %981 = vst [vmem:[%s195 + $0x80] sm:$0xff] %v949
        %982 = vst [vmem:[%s195 + $0x88] sm:$0xff] %v950
        %983 = vst [vmem:[%s195 + $0x90] sm:$0xff] %v951
        %984 = vst [vmem:[%s195 + $0x98] sm:$0xff] %v952
        %985 = vst [vmem:[%s195 + $0xa0] sm:$0xff] %v953
        %986 = vst [vmem:[%s195 + $0xa8] sm:$0xff] %v954
        %987 = vst [vmem:[%s195 + $0xb0] sm:$0xff] %v955
        %988 = vst [vmem:[%s195 + $0xb8] sm:$0xff] %v956
        %989 = vst [vmem:[%s195 + $0xc0] sm:$0xff] %v957
        %990 = vst [vmem:[%s195 + $0xc8] sm:$0xff] %v958
        %991 = vst [vmem:[%s195 + $0xd0] sm:$0xff] %v959
        %992 = vst [vmem:[%s195 + $0xd8] sm:$0xff] %v960
        %993 = vst [vmem:[%s195 + $0xe0] sm:$0xff] %v961
        %994 = vst [vmem:[%s195 + $0xe8] sm:$0xff] %v962
        %995 = vst [vmem:[%s195 + $0xf0] sm:$0xff] %v963
        %996 = vst [vmem:[%s195 + $0xf8] sm:$0xff] %v964
      $region40: #{mb_seeder_forward.3} parent=31 // pred_fallthru
        _
      %p997 = scmp.lt.s32.totalorder %s18, 1
      %s998 = scalar_select %p997, %s18, 1
      %s999 = smul.addr %s998, 32
      %s1000 = smul.addr %s999, 8
      %s1001 = scalar_lea.vmem %s3, %s1000
      // Predicated region
      $region41: #{mb_seeder_forward.3} parent=31 // pred_check
        %p1002 = pneg %p114
      $region42: #{mb_seeder_forward.3} parent=31 // pred_check_branch
        %1004 = sbr.rel (%p1002) target = $region44
      $region43: #{mb_seeder_forward.3} parent=31 // pred_region
        _
      $region44: #{mb_seeder_forward.3} parent=31 // pred_fallthru
        _
    $region32: #{mb_seeder_forward.3} parent=5 // pred_fallthru
      _
    %p1005 = scmp.le.s32.totalorder 2, %s9
    // Predicated region
    $region45: #{mb_seeder_forward.3} parent=5 // pred_check
      %p1006 = pneg %p1005
    $region46: #{mb_seeder_forward.3} parent=5 // pred_check_branch
      %1008 = sbr.rel (%p1006) target = $region48
    $region47: #{mb_seeder_forward.3} parent=5 // pred_region
      %s1009 = ssub.s32 %s9, 2
      // Predicated region
      $region49: #{mb_seeder_forward.3} parent=47 // pred_check
        %p1010 = pneg %p120
      $region50: #{mb_seeder_forward.3} parent=47 // pred_check_branch
        %1012 = sbr.rel (%p1010) target = $region52
      $region51: #{mb_seeder_forward.3} parent=47 // pred_region
        %p1013 = scmp.lt.s32.totalorder %s20, 1
        %s1014 = scalar_select %p1013, %s20, 1
        %s1015 = smul.addr %s1014, 32
        %s1016 = smul.addr %s1015, 8
        %s1017 = scalar_lea.vmem %s3, %s1016
      $region52: #{mb_seeder_forward.3} parent=47 // pred_fallthru
        _
    $region48: #{mb_seeder_forward.3} parent=5 // pred_fallthru
      _
  $region6: #{mb_seeder_forward.3} parent=0 // loop_footer
    %s13 = sadd.s32 1, %s9
  $region7: #{mb_seeder_forward.3} parent=0 // loop_footer_branch
    %8 = sbr.rel target = $region3
  $region8: #{mb_seeder_forward.3} parent=0 // loop_exit
    _

// kernel: mb_seeder_forward.4
$region0: #{mb_seeder_forward.4}
  #allocation0 [shape = 'u32[]', space=smem, size = 0x4, offset = 0x4, fixed_abs, tag = 'smem constant byte address 0x4 - core index']
  #allocation1 [shape = 'u32[72,128]{1,0:T(1,128)}', space=vmem, size = 0x9000, scoped, tag = 'internal scratch']
  %s0 = inlined_call_operand.vmem [shape: f32[8,256], index: 0, kind: input, shape index: {}]
  %s1 = inlined_call_operand.vmem [shape: f32[8,1], index: 1, kind: input, shape index: {}]
  %s2 = inlined_call_operand.vmem [shape: f32[4,256], index: 2, kind: input, shape index: {}]
  %s3 = inlined_call_operand.vmem [shape: f32[8,256], index: 3, kind: output, shape index: {}]
  %s4 = sld [smem:[#allocation0]]
  $region22: #{mb_seeder_forward.4} parent=0
    _
  %s6 = ssub.s32 1, %s4
  %s7 = scalar_select 0, %s6, %s4
  // Predicated region
  $region2: #{mb_seeder_forward.4} parent=0 // pred_check
    _
  $region3: #{mb_seeder_forward.4} parent=0 // pred_check_branch
    %9 = sbr.rel (0) target = $region5
  $region4: #{mb_seeder_forward.4} parent=0 // pred_region
    _
  $region5: #{mb_seeder_forward.4} parent=0 // pred_fallthru
    _
  // Predicated region
  $region6: #{mb_seeder_forward.4} parent=0 // pred_check
    _
  $region7: #{mb_seeder_forward.4} parent=0 // pred_check_branch
    %11 = sbr.rel (0) target = $region9
  $region8: #{mb_seeder_forward.4} parent=0 // pred_region
    _
  $region9: #{mb_seeder_forward.4} parent=0 // pred_fallthru
    _
  // Predicated region
  $region10: #{mb_seeder_forward.4} parent=0 // pred_check
    _
  $region11: #{mb_seeder_forward.4} parent=0 // pred_check_branch
    %13 = sbr.rel (0) target = $region13
  $region12: #{mb_seeder_forward.4} parent=0 // pred_region
    _
  $region13: #{mb_seeder_forward.4} parent=0 // pred_fallthru
    _
  %v14 = vld [vmem:[%s0] sm:$0xff]
  %v15 = vld [vmem:[%s0 + $0x8] sm:$0xff]
  %v16 = vmul.f32 %v14, 255.0
  %v17 = vmul.f32 %v15, 255.0
  %v18 = vfloor.f32 %v16
  %v19 = vfloor.f32 %v17
  %v20 = vld [vmem:[%s1] sm:$0xff]
  %22 = vset.pattern.permute.xlu0 0
  %23 = vperm.xlu0 %22, %v20
  %v24 = vpop.permute.xlu0 %23
  %vm26 = vcmp.gt.f32.partialorder %v18, %v24
  %vm27 = vcmp.gt.f32.partialorder %v19, %v24
  %v28 = vsel %vm26, 1, 0
  %v29 = vsel %vm27, 1, 0
  %v30 = vcvt.s32.f32 %v28
  %v31 = vcvt.s32.f32 %v29
  %v32 = vld [vmem:[%s2] sm:$0xff]
  %v33 = vsub.f32 1.0, %v30
  %v34 = vsub.f32 1.0, %v31
  %35 = vrot.lane.b32.xlu0 %v33, 127
  %v36 = vpop.permute.xlu0 %35
  %37 = vrot.lane.b32.xlu0 %v34, 127
  %v38 = vpop.permute.xlu0 %37
  %v39 = vlaneseq
  %v40 = vand.u32 %v39, 127
  %vm41 = vcmp.lt.s32.totalorder %v40, 127
  %v42 = vsel %vm41, %v36, %v38
  %v43 = vsel %vm41, %v38, %v36
  %v45 = vperm.slane %v32, 0
  %v46 = vperm.slane %v32, 4
  %v49 = vperm.slane %v45, 0
  %v50 = vperm.slane %v46, 0
  %v51 = vmul.f32 %v42, %v49
  %v52 = vmul.f32 %v43, %v50
  %53 = vrot.lane.b32.xlu0 %v33, 1
  %v54 = vpop.permute.xlu0 %53
  %55 = vrot.lane.b32.xlu0 %v34, 1
  %v56 = vpop.permute.xlu0 %55
  %vm57 = vcmp.lt.s32.totalorder %v40, 1
  %v58 = vsel %vm57, %v54, %v56
  %v59 = vsel %vm57, %v56, %v54
  %v60 = vperm.slane %v32, 1
  %v61 = vperm.slane %v32, 5
  %v64 = vperm.slane %v60, 1
  %v65 = vperm.slane %v61, 1
  %v66 = vmul.f32 %v59, %v64
  %v67 = vmul.f32 %v58, %v65
  %v68 = vmax.f32 %v51, %v66
  %v69 = vmax.f32 %v52, %v67
  %v70 = vmax.f32 %v33, %v68
  %v71 = vmax.f32 %v34, %v69
  %72 = vrot.lane.b32.xlu0 %v70, 112
  %v73 = vpop.permute.xlu0 %72
  %74 = vrot.lane.b32.xlu0 %v71, 112
  %v75 = vpop.permute.xlu0 %74
  %vm76 = vcmp.lt.s32.totalorder %v40, 112
  %v77 = vsel %vm76, %v73, %v75
  %v78 = vsel %vm76, %v75, %v73
  %v79 = vperm.slane %v32, 2
  %v80 = vperm.slane %v32, 6
  %v83 = vperm.slane %v79, 2
  %v84 = vperm.slane %v80, 2
  %v85 = vmul.f32 %v77, %v83
  %v86 = vmul.f32 %v78, %v84
  %87 = vrot.lane.b32.xlu0 %v70, 16
  %v88 = vpop.permute.xlu0 %87
  %89 = vrot.lane.b32.xlu0 %v71, 16
  %v90 = vpop.permute.xlu0 %89
  %vm91 = vcmp.lt.s32.totalorder %v40, 16
  %v92 = vsel %vm91, %v88, %v90
  %v93 = vsel %vm91, %v90, %v88
  %v94 = vperm.slane %v32, 3
  %v95 = vperm.slane %v32, 7
  %v98 = vperm.slane %v94, 3
  %v99 = vperm.slane %v95, 3
  %v100 = vmul.f32 %v93, %v98
  %v101 = vmul.f32 %v92, %v99
  %v102 = vmax.f32 %v85, %v100
  %v103 = vmax.f32 %v86, %v101
  %v104 = vmax.f32 %v70, %v102
  %v105 = vmax.f32 %v71, %v103
  %v106 = vsub.f32 1.0, %v104
  %v107 = vsub.f32 1.0, %v105
  %108 = vst [vmem:[%s3] sm:$0xff] %v106
  %109 = vst [vmem:[%s3 + $0x8] sm:$0xff] %v107
  // Predicated region
  $region14: #{mb_seeder_forward.4} parent=0 // pred_check
    _
  $region15: #{mb_seeder_forward.4} parent=0 // pred_check_branch
    %111 = sbr.rel (0) target = $region17
  $region16: #{mb_seeder_forward.4} parent=0 // pred_region
    _
  $region17: #{mb_seeder_forward.4} parent=0 // pred_fallthru
    _
  // Predicated region
  $region18: #{mb_seeder_forward.4} parent=0 // pred_check
    _
  $region19: #{mb_seeder_forward.4} parent=0 // pred_check_branch
    %113 = sbr.rel (0) target = $region21
  $region20: #{mb_seeder_forward.4} parent=0 // pred_region
    _
  $region21: #{mb_seeder_forward.4} parent=0 // pred_fallthru
    _

// kernel: mb_seeder_forward.5
$region0: #{mb_seeder_forward.5}
  #allocation0 [shape = 'u32[]', space=smem, size = 0x4, offset = 0x4, fixed_abs, tag = 'smem constant byte address 0x4 - core index']
  #allocation1 [shape = 'u32[72,128]{1,0:T(1,128)}', space=vmem, size = 0x9000, scoped, tag = 'internal scratch']
  %s0 = inlined_call_operand.vmem [shape: f32[8,256], index: 0, kind: input, shape index: {}]
  %s1 = inlined_call_operand.vmem [shape: f32[8,256], index: 1, kind: input, shape index: {}]
  %s2 = inlined_call_operand.vmem [shape: f32[4,256], index: 2, kind: input, shape index: {}]
  %s3 = inlined_call_operand.vmem [shape: s32[8,256], index: 3, kind: output, shape index: {}]
  %s4 = sld [smem:[#allocation0]]
  $region22: #{mb_seeder_forward.5} parent=0
    _
  %s6 = ssub.s32 1, %s4
  %s7 = scalar_select 0, %s6, %s4
  // Predicated region
  $region2: #{mb_seeder_forward.5} parent=0 // pred_check
    _
  $region3: #{mb_seeder_forward.5} parent=0 // pred_check_branch
    %9 = sbr.rel (0) target = $region5
  $region4: #{mb_seeder_forward.5} parent=0 // pred_region
    _
  $region5: #{mb_seeder_forward.5} parent=0 // pred_fallthru
    _
  // Predicated region
  $region6: #{mb_seeder_forward.5} parent=0 // pred_check
    _
  $region7: #{mb_seeder_forward.5} parent=0 // pred_check_branch
    %11 = sbr.rel (0) target = $region9
  $region8: #{mb_seeder_forward.5} parent=0 // pred_region
    _
  $region9: #{mb_seeder_forward.5} parent=0 // pred_fallthru
    _
  // Predicated region
  $region10: #{mb_seeder_forward.5} parent=0 // pred_check
    _
  $region11: #{mb_seeder_forward.5} parent=0 // pred_check_branch
    %13 = sbr.rel (0) target = $region13
  $region12: #{mb_seeder_forward.5} parent=0 // pred_region
    _
  $region13: #{mb_seeder_forward.5} parent=0 // pred_fallthru
    _
  %v14 = vld [vmem:[%s2] sm:$0xff]
  %v15 = vld [vmem:[%s0] sm:$0xff]
  %v16 = vld [vmem:[%s0 + $0x8] sm:$0xff]
  %v17 = vld [vmem:[%s1] sm:$0xff]
  %v18 = vld [vmem:[%s1 + $0x8] sm:$0xff]
  %19 = vrot.lane.b32.xlu0 %v15, 127
  %v20 = vpop.permute.xlu0 %19
  %21 = vrot.lane.b32.xlu0 %v17, 127
  %v22 = vpop.permute.xlu0 %21
  %23 = vrot.lane.b32.xlu0 %v16, 127
  %v24 = vpop.permute.xlu0 %23
  %25 = vrot.lane.b32.xlu0 %v18, 127
  %v26 = vpop.permute.xlu0 %25
  %v27 = vlaneseq
  %v28 = vand.u32 %v27, 127
  %vm29 = vcmp.lt.s32.totalorder %v28, 127
  %v30 = vsel %vm29, %v20, %v24
  %v31 = vsel %vm29, %v22, %v26
  %v32 = vsel %vm29, %v24, %v20
  %v33 = vsel %vm29, %v26, %v22
  %v35 = vperm.slane %v14, 0
  %v36 = vperm.slane %v14, 4
  %v39 = vperm.slane %v35, 0
  %v40 = vperm.slane %v36, 0
  %v41 = vmul.f32 %v30, %v39
  %v42 = vmul.f32 %v32, %v40
  %v43 = vmul.f32 %v31, %v39
  %v44 = vmul.f32 %v33, %v40
  %45 = vrot.lane.b32.xlu0 %v15, 1
  %v46 = vpop.permute.xlu0 %45
  %47 = vrot.lane.b32.xlu0 %v17, 1
  %v48 = vpop.permute.xlu0 %47
  %49 = vrot.lane.b32.xlu0 %v16, 1
  %v50 = vpop.permute.xlu0 %49
  %51 = vrot.lane.b32.xlu0 %v18, 1
  %v52 = vpop.permute.xlu0 %51
  %vm53 = vcmp.lt.s32.totalorder %v28, 1
  %v54 = vsel %vm53, %v46, %v50
  %v55 = vsel %vm53, %v48, %v52
  %v56 = vsel %vm53, %v50, %v46
  %v57 = vsel %vm53, %v52, %v48
  %v58 = vperm.slane %v14, 1
  %v59 = vperm.slane %v14, 5
  %v62 = vperm.slane %v58, 1
  %v63 = vperm.slane %v59, 1
  %v64 = vmul.f32 %v56, %v62
  %v65 = vmul.f32 %v54, %v63
  %v66 = vmul.f32 %v57, %v62
  %v67 = vmul.f32 %v55, %v63
  %v68 = vmax.f32 %v41, %v64
  %v69 = vmax.f32 %v42, %v65
  %v70 = vmax.f32 %v43, %v66
  %v71 = vmax.f32 %v44, %v67
  %v72 = vmax.f32 %v15, %v68
  %v73 = vmax.f32 %v16, %v69
  %v74 = vmax.f32 %v17, %v70
  %v75 = vmax.f32 %v18, %v71
  %76 = vrot.lane.b32.xlu0 %v72, 112
  %v77 = vpop.permute.xlu0 %76
  %78 = vrot.lane.b32.xlu0 %v74, 112
  %v79 = vpop.permute.xlu0 %78
  %80 = vrot.lane.b32.xlu0 %v73, 112
  %v81 = vpop.permute.xlu0 %80
  %82 = vrot.lane.b32.xlu0 %v75, 112
  %v83 = vpop.permute.xlu0 %82
  %vm84 = vcmp.lt.s32.totalorder %v28, 112
  %v85 = vsel %vm84, %v77, %v81
  %v86 = vsel %vm84, %v79, %v83
  %v87 = vsel %vm84, %v81, %v77
  %v88 = vsel %vm84, %v83, %v79
  %v89 = vperm.slane %v14, 2
  %v90 = vperm.slane %v14, 6
  %v93 = vperm.slane %v89, 2
  %v94 = vperm.slane %v90, 2
  %v95 = vmul.f32 %v85, %v93
  %v96 = vmul.f32 %v87, %v94
  %v97 = vmul.f32 %v86, %v93
  %v98 = vmul.f32 %v88, %v94
  %99 = vrot.lane.b32.xlu0 %v72, 16
  %v100 = vpop.permute.xlu0 %99
  %101 = vrot.lane.b32.xlu0 %v74, 16
  %v102 = vpop.permute.xlu0 %101
  %103 = vrot.lane.b32.xlu0 %v73, 16
  %v104 = vpop.permute.xlu0 %103
  %105 = vrot.lane.b32.xlu0 %v75, 16
  %v106 = vpop.permute.xlu0 %105
  %vm107 = vcmp.lt.s32.totalorder %v28, 16
  %v108 = vsel %vm107, %v100, %v104
  %v109 = vsel %vm107, %v102, %v106
  %v110 = vsel %vm107, %v104, %v100
  %v111 = vsel %vm107, %v106, %v102
  %v112 = vperm.slane %v14, 3
  %v113 = vperm.slane %v14, 7
  %v116 = vperm.slane %v112, 3
  %v117 = vperm.slane %v113, 3
  %v118 = vmul.f32 %v110, %v116
  %v119 = vmul.f32 %v108, %v117
  %v120 = vmul.f32 %v111, %v116
  %v121 = vmul.f32 %v109, %v117
  %v122 = vmax.f32 %v95, %v118
  %v123 = vmax.f32 %v96, %v119
  %v124 = vmax.f32 %v97, %v120
  %v125 = vmax.f32 %v98, %v121
  %v126 = vmax.f32 %v72, %v122
  %v127 = vmax.f32 %v73, %v123
  %v128 = vmax.f32 %v74, %v124
  %v129 = vmax.f32 %v75, %v125
  %vm130 = vcmp.gt.f32.partialorder %v126, 0.5
  %vm131 = vcmp.gt.f32.partialorder %v127, 0.5
  %vm132 = vcmp.gt.f32.partialorder %v128, 0.5
  %vm133 = vcmp.gt.f32.partialorder %v129, 0.5
  %vm134 = vmand %vm130, %vm132
  %vm135 = vmand %vm131, %vm133
  %vm136 = vmxor %vm134, 1
  %vm137 = vmxor %vm135, 1
  %vm138 = vmand %vm130, %vm136
  %vm139 = vmand %vm131, %vm137
  %vm140 = vmand %vm132, %vm136
  %vm141 = vmand %vm133, %vm137
  %v142 = vsel %vm140, 0, 4294967041
  %v143 = vsel %vm141, 0, 4294967041
  %v144 = vsel %vm138, 1, %v142
  %v145 = vsel %vm139, 1, %v143
  %146 = vst [vmem:[%s3] sm:$0xff] %v144
  %147 = vst [vmem:[%s3 + $0x8] sm:$0xff] %v145
  // Predicated region
  $region14: #{mb_seeder_forward.5} parent=0 // pred_check
    _
  $region15: #{mb_seeder_forward.5} parent=0 // pred_check_branch
    %149 = sbr.rel (0) target = $region17
  $region16: #{mb_seeder_forward.5} parent=0 // pred_region
    _
  $region17: #{mb_seeder_forward.5} parent=0 // pred_fallthru
    _
  // Predicated region
  $region18: #{mb_seeder_forward.5} parent=0 // pred_check
    _
  $region19: #{mb_seeder_forward.5} parent=0 // pred_check_branch
    %151 = sbr.rel (0) target = $region21
  $region20: #{mb_seeder_forward.5} parent=0 // pred_region
    _
  $region21: #{mb_seeder_forward.5} parent=0 // pred_fallthru
    _

</llo_original>
